<compile_context>
chip_gen: v5e
topology: v5e:2x2
jax: 0.10.0
libtpu: 0.0.40
codegen_flags: <defaults>
</compile_context>

<pallas_src>
import functools

import jax
import jax.numpy as jnp
import numpy as np
from jax.experimental import pallas as pl
from jax.experimental.pallas import tpu as pltpu

N_NODES = 16               # nodes per graph (N*H == 128 -> roll-based softmax)
IN_FEATURES = 32           # == n_model so the GATNetwork residual is well-defined
N_MODEL = 32
N_HEADS = 8
N_HIDDEN = N_MODEL // N_HEADS   # 4
LEAKY_SLOPE = 0.2
N_GRAPHS = 16              # graphs in the test batch
GRAPHS_PER_BLOCK = 8       # graphs fused per grid step -> M = 128 rows/step


def _gat_v1_kernel(x_ref, bias_ref, wcat_ref, rowsel_ref, blockmat_ref,
                   rep_ref, headmask_ref, out_ref, *,
                   n_nodes, n_heads, n_hidden, graphs_per_block):
    """Fused GAT-v1 layer + residual for `graphs_per_block` graphs (one grid step)."""
    N, H, F, G = n_nodes, n_heads, n_hidden, graphs_per_block
    NH = N * H                                        # 128 (one full lane width)

    x = x_ref[...]                                    # (G*N, Din)

    # (1) ONE fused projection on the MXU for all graphs in the block.
    #   cols [0 : NH)        dst-side logit term, lane L=j*H+h -> q_dst[row, h]
    #   cols [NH : 2NH)      src-side base,       lane L=j*H+h -> q_src[row, h]
    #   cols [2NH : 2NH+HF)  plain node projection g = x @ W.T (head-major)
    g_all = jnp.dot(x, wcat_ref[...], preferred_element_type=jnp.float32)
    e_dst = g_all[:, :NH]                             # (G*N, NH)  lane-dense
    src_base = g_all[:, NH:2 * NH]                    # (G*N, NH)
    g_flat = g_all[:, 2 * NH:]                        # (G*N, H*F)

    # (2) src-side logit term: segmented (per-graph) reduce on the MXU.
    #     rowsel[r, j*H+h] = (j == r % N)   (precomputed constant)
    #     blockmat[r1, r2] = same-graph indicator (precomputed constant)
    #     => e_src[b*N+i, j*H+h] = q_src[b*N+j, h]
    e_src = jnp.dot(blockmat_ref[...], rowsel_ref[...] * src_base,
                    preferred_element_type=jnp.float32)

    e = e_dst + e_src                                 # raw logits, all graphs/heads
    e = jnp.where(e >= 0.0, e, LEAKY_SLOPE * e)       # LeakyReLU(0.2)
    e = e + bias_ref[...]                             # adj mask + selfloop quirk (0/-inf)

    # (3) per-(dst, head) softmax over src j.  Lanes of one head form a stride-H
    #     residue class within the 128-lane row, so cyclic lane rolls by
    #     H, 2H, 4H, ... perform an in-class all-reduce (requires N*H == 128).
    shifts = []
    s = H
    while s < NH:
        shifts.append(s)
        s *= 2
    m = e
    for sh in shifts:
        m = jnp.maximum(m, pltpu.roll(m, shift=sh, axis=1))
    m = jnp.where(m == -jnp.inf, 0.0, m)              # safe softmax (all-masked row)
    p = jnp.exp(e - m)                                # masked lanes -> exp(-inf) = 0
    # TODO(synk): attention dropout (p=0.6) on the weights skipped - eval identity.
    denom = p
    for sh in shifts:
        denom = denom + pltpu.roll(denom, shift=sh, axis=1)
    denom = jnp.where(denom > 0.0, denom, 1.0)        # guard fully-masked rows
    a = p * pl.reciprocal(denom, approx=False)        # divide on the EUP slot

    # (4) per-graph block-diagonal aggregation.  For graph b:
    #     g_big[j*H+h, h'F+f] = g[b,j,hF+f]*(h==h'); attn_b = a_b @ g_big (K = 128).
    rep = rep_ref[...]                                # (NH, N)   constant replicator
    hm = headmask_ref[...]                            # (NH, H*F) constant head mask
    parts = []
    for b in range(G):                                # static unroll over graphs
        lo, hi = b * N, (b + 1) * N
        g_big = jnp.dot(rep, g_flat[lo:hi, :],
                        preferred_element_type=jnp.float32) * hm
        parts.append(jnp.dot(a[lo:hi, :], g_big,
                             preferred_element_type=jnp.float32))
    attn = jnp.concatenate(parts, axis=0)             # (G*N, H*F)

    out_ref[...] = x + attn                           # residual; single contiguous store


def _fold_weights(w_lin, attn_w, *, n_nodes, n_heads, n_hidden):
    """Fold linear + attn weights (incl. the module's cat/view head re-interleave
    and the lane layout L = j*H + h) into one (Din, 2*N*H + H*F) matrix."""
    H, F, N = n_heads, n_hidden, n_nodes
    W_t = np.asarray(w_lin, np.float32).T            # (Din, H*F)
    aw = np.asarray(attn_w, np.float32)[0]           # (2F,)
    aw1, aw2 = aw[:F], aw[F:]
    # Head h reads features of heads (2h)%H and (2h+1)%H; from the src node j if
    # 2h (resp. 2h+1) < H, otherwise from the dst node i.
    p1 = np.zeros((H * F, H), np.float32)
    p2 = np.zeros((H * F, H), np.float32)
    src1 = np.zeros((H,), np.float32)
    src2 = np.zeros((H,), np.float32)
    for h in range(H):
        k1, k2 = (2 * h) % H, (2 * h + 1) % H
        p1[k1 * F:(k1 + 1) * F, h] = aw1
        p2[k2 * F:(k2 + 1) * F, h] = aw2
        src1[h] = 1.0 if 2 * h < H else 0.0
        src2[h] = 1.0 if 2 * h + 1 < H else 0.0
    wq_src = W_t @ (p1 * src1 + p2 * src2)            # (Din, H)
    wq_dst = W_t @ (p1 * (1.0 - src1) + p2 * (1.0 - src2))
    w_cat = np.concatenate([np.tile(wq_dst, (1, N)),  # lanes L = j*H + h
                            np.tile(wq_src, (1, N)),
                            W_t], axis=1)             # (Din, 2*N*H + H*F)
    return jnp.asarray(w_cat)


def _selector_constants(n_nodes, n_heads, n_hidden, graphs_per_block):
    """Compile-time selector tensors, hoisted out of the kernel body."""
    N, H, F, G = n_nodes, n_heads, n_hidden, graphs_per_block
    NH, GN = N * H, G * N
    lane = np.arange(NH)
    row = np.arange(GN)
    rowsel = (lane[None, :] // H == (row[:, None] % N)).astype(np.float32)      # (GN, NH)
    blockmat = ((row[:, None] // N) == (row[None, :] // N)).astype(np.float32)  # (GN, GN)
    k = np.arange(NH)
    rep = (k[:, None] // H == np.arange(N)[None, :]).astype(np.float32)         # (NH, N)
    c = np.arange(H * F)
    headmask = ((k[:, None] % H) == (c[None, :] // F)).astype(np.float32)       # (NH, H*F)
    return (jnp.asarray(rowsel), jnp.asarray(blockmat),
            jnp.asarray(rep), jnp.asarray(headmask))


def gat_network_forward(x, adj, w_lin, attn_w, *, n_heads=N_HEADS, n_hidden=N_HIDDEN,
                        graphs_per_block=GRAPHS_PER_BLOCK):
    """GATNetwork.forward (1 layer, v1) for a batch of graphs.

    x   : (B, N, Din)   node features per graph
    adj : (B, N, N, 1)  adjacency (dst, src, head-broadcast dim)
    """
    B, N, Din = x.shape
    H, F = n_heads, n_hidden
    NH = N * H
    # The roll-based segmented softmax assumes the per-graph lane width is exactly
    # one vreg lane width; generalize with a stride-aware reduce for other shapes.
    assert NH == 128, "roll-based segmented softmax requires N * n_heads == 128"
    G = min(graphs_per_block, B)
    assert B % G == 0
    GN = G * N

    w_cat = _fold_weights(w_lin, attn_w, n_nodes=N, n_heads=H, n_hidden=F)
    rowsel, blockmat, rep, headmask = _selector_constants(N, H, F, G)

    # Additive attention bias precomputed in XLA: 0 for kept edges, -inf otherwise.
    # GATNetwork's selfloop quirk (adj.diagonal(0,1,2).fill_(1.) on an (N,N,1)
    # adj == "src column j==0 kept for every dst") is folded in here.
    adj2d = adj[..., 0]                               # (B, N, N)
    src_idx = jnp.arange(N)[None, None, :]
    keep = (adj2d != 0.0) | (src_idx == 0)
    bias = jnp.where(keep, 0.0, -jnp.inf).astype(jnp.float32)
    bias = jnp.repeat(bias, H, axis=2)                # (B, N, N*H), lane L = j*H + h
    bias2d = bias.reshape(B * N, NH)

    x2d = x.reshape(B * N, Din)                       # graphs stacked along sublanes

    kernel = functools.partial(_gat_v1_kernel, n_nodes=N, n_heads=H, n_hidden=F,
                               graphs_per_block=G)
    n_blocks = B // G
    # TODO(synk): bf16 MXU operands (and large-N tiling for v7x's 64 MiB VMEM) are
    # irrelevant at this size and would break the 1e-5 check; revisit at scale.
    out2d = pl.pallas_call(
        kernel,
        out_shape=jax.ShapeDtypeStruct((B * N, H * F), jnp.float32),
        grid=(n_blocks,),
        in_specs=[
            pl.BlockSpec((GN, Din), lambda s: (s, 0)),            # node features
            pl.BlockSpec((GN, NH), lambda s: (s, 0)),             # additive mask bias
            pl.BlockSpec((Din, int(w_cat.shape[1])), lambda s: (0, 0)),  # resident weights
            pl.BlockSpec((GN, NH), lambda s: (0, 0)),             # rowsel constant
            pl.BlockSpec((GN, GN), lambda s: (0, 0)),             # same-graph block matrix
            pl.BlockSpec((NH, N), lambda s: (0, 0)),              # head replicator
            pl.BlockSpec((NH, H * F), lambda s: (0, 0)),          # block-diag head mask
        ],
        out_specs=pl.BlockSpec((GN, H * F), lambda s: (s, 0)),
        compiler_params=pltpu.CompilerParams(
            dimension_semantics=("parallel",)),       # 2 steps -> both TCs on v7x
    )(x2d, bias2d, w_cat, rowsel, blockmat, rep, headmask)
    return out2d.reshape(B, N, H * F)


def ref_forward(x, adj, w_lin, attn_w, *, n_heads=N_HEADS, n_hidden=N_HIDDEN):
    """Pure-JAX mirror of the PyTorch forward (for verification)."""
    B, N, _ = x.shape
    H, F = n_heads, n_hidden
    adj = adj.at[:, :, 0, 0].set(1.0)                 # selfloop: diagonal(0,1,2).fill_(1.)

    def one(xg, adjg):
        g = (xg @ w_lin.T).reshape(N, H, F)
        g_repeat = jnp.tile(g, (N, 1, 1))             # torch .repeat(N, 1, 1)
        g_ri = jnp.repeat(g, N, axis=0)               # torch .repeat_interleave(N, 0)
        g_concat = jnp.concatenate([g_repeat, g_ri], axis=1).reshape(N, N, H, 2 * F)
        e = jnp.einsum('ijhc,c->ijh', g_concat, attn_w[0])
        e = jnp.where(e >= 0, e, LEAKY_SLOPE * e)     # LeakyReLU
        e = jnp.where(adjg == 0, -jnp.inf, e)         # masked_fill
        a = jax.nn.softmax(e, axis=1)
        attn_res = jnp.einsum('ijh,jhf->ihf', a, g)
        return xg + attn_res.reshape(N, H * F)        # is_concat reshape + residual

    return jax.vmap(one)(x, adj)


if __name__ == "__main__":
    key = jax.random.PRNGKey(0)
    kx, kadj, kw, ka = jax.random.split(key, 4)

    x = jax.random.normal(kx, (N_GRAPHS, N_NODES, IN_FEATURES), dtype=jnp.float32)
    adj = (jax.random.uniform(kadj, (N_GRAPHS, N_NODES, N_NODES, 1)) > 0.5
           ).astype(jnp.float32)

    # GraphAttentionLayer params (deterministic synthetic init):
    w_lin = 0.1 * jax.random.normal(kw, (N_HEADS * N_HIDDEN, IN_FEATURES),
                                    dtype=jnp.float32)
    attn_w = 0.1 * jax.random.normal(ka, (1, 2 * N_HIDDEN), dtype=jnp.float32)

    out = jax.block_until_ready(gat_network_forward(x, adj, w_lin, attn_w))
    ref = jax.block_until_ready(ref_forward(x, adj, w_lin, attn_w))
    np.testing.assert_allclose(np.asarray(out), np.asarray(ref), rtol=1e-5, atol=1e-5)

    print("KERNEL_OK")
</pallas_src>

<mosaic_0001>
module attributes {stable_mosaic.version = 11 : i64} {
  func.func @_gat_v1_kernel(%arg0: i32, %arg1: memref<128x32xf32, #tpu.memory_space<vmem>>, %arg2: memref<128x128xf32, #tpu.memory_space<vmem>>, %arg3: memref<32x288xf32, #tpu.memory_space<vmem>>, %arg4: memref<128x128xf32, #tpu.memory_space<vmem>>, %arg5: memref<128x128xf32, #tpu.memory_space<vmem>>, %arg6: memref<128x16xf32, #tpu.memory_space<vmem>>, %arg7: memref<128x32xf32, #tpu.memory_space<vmem>>, %arg8: memref<128x32xf32, #tpu.memory_space<vmem>>) attributes {dimension_semantics = [#tpu.dimension_semantics<parallel>], iteration_bounds = array<i64: 2>, scalar_prefetch = 0 : i64, scratch_operands = 0 : i64, tpu.core_type = #tpu.core_type<tc>, window_params = [{transform_indices = @transform_0, window_bounds = array<i64: 128, 32>}, {transform_indices = @transform_1, window_bounds = array<i64: 128, 128>}, {pipeline_mode = #tpu.pipeline_mode<synchronous>, transform_indices = @transform_2, window_bounds = array<i64: 32, 288>}, {pipeline_mode = #tpu.pipeline_mode<synchronous>, transform_indices = @transform_3, window_bounds = array<i64: 128, 128>}, {pipeline_mode = #tpu.pipeline_mode<synchronous>, transform_indices = @transform_4, window_bounds = array<i64: 128, 128>}, {pipeline_mode = #tpu.pipeline_mode<synchronous>, transform_indices = @transform_5, window_bounds = array<i64: 128, 16>}, {pipeline_mode = #tpu.pipeline_mode<synchronous>, transform_indices = @transform_6, window_bounds = array<i64: 128, 32>}, {transform_indices = @transform_7, window_bounds = array<i64: 128, 32>}]} {
    %c0 = arith.constant 0 : index
    %c0_0 = arith.constant 0 : index
    %0 = vector.load %arg1[%c0, %c0_0] : memref<128x32xf32, #tpu.memory_space<vmem>>, vector<128x32xf32>
    %c0_1 = arith.constant 0 : index
    %c0_2 = arith.constant 0 : index
    %1 = vector.load %arg3[%c0_1, %c0_2] : memref<32x288xf32, #tpu.memory_space<vmem>>, vector<32x288xf32>
    %cst = arith.constant dense<0.000000e+00> : vector<128x288xf32>
    %2 = tpu.matmul %0, %1, %cst {dimension_numbers = #tpu.dot_dimension_numbers<[1], [0], [0], [1], [0, 0, 1, 1], [], []>} : vector<128x32xf32>, vector<32x288xf32>, vector<128x288xf32> -> vector<128x288xf32>
    %3 = vector.extract_strided_slice %2 {offsets = [0, 0], sizes = [128, 128], strides = [1, 1]} : vector<128x288xf32> to vector<128x128xf32>
    %4 = vector.extract_strided_slice %2 {offsets = [0, 128], sizes = [128, 128], strides = [1, 1]} : vector<128x288xf32> to vector<128x128xf32>
    %5 = vector.extract_strided_slice %2 {offsets = [0, 256], sizes = [128, 32], strides = [1, 1]} : vector<128x288xf32> to vector<128x32xf32>
    %c0_3 = arith.constant 0 : index
    %c0_4 = arith.constant 0 : index
    %6 = vector.load %arg5[%c0_3, %c0_4] : memref<128x128xf32, #tpu.memory_space<vmem>>, vector<128x128xf32>
    %c0_5 = arith.constant 0 : index
    %c0_6 = arith.constant 0 : index
    %7 = vector.load %arg4[%c0_5, %c0_6] : memref<128x128xf32, #tpu.memory_space<vmem>>, vector<128x128xf32>
    %8 = arith.mulf %7, %4 : vector<128x128xf32>
    %cst_7 = arith.constant dense<0.000000e+00> : vector<128x128xf32>
    %9 = tpu.matmul %6, %8, %cst_7 {dimension_numbers = #tpu.dot_dimension_numbers<[1], [0], [0], [1], [0, 0, 1, 1], [], []>} : vector<128x128xf32>, vector<128x128xf32>, vector<128x128xf32> -> vector<128x128xf32>
    %10 = arith.addf %3, %9 : vector<128x128xf32>
    %cst_8 = arith.constant 0.000000e+00 : f32
    %11 = vector.broadcast %cst_8 : f32 to vector<128x128xf32>
    %12 = arith.cmpf oge, %10, %11 : vector<128x128xf32>
    %cst_9 = arith.constant 2.000000e-01 : f32
    %13 = vector.broadcast %cst_9 : f32 to vector<128x128xf32>
    %14 = arith.mulf %13, %10 : vector<128x128xf32>
    %15 = arith.select %12, %10, %14 : vector<128x128xi1>, vector<128x128xf32>
    %c0_10 = arith.constant 0 : index
    %c0_11 = arith.constant 0 : index
    %16 = vector.load %arg2[%c0_10, %c0_11] : memref<128x128xf32, #tpu.memory_space<vmem>>, vector<128x128xf32>
    %17 = arith.addf %15, %16 : vector<128x128xf32>
    %c8_i32 = arith.constant 8 : i32
    %18 = tpu.dynamic_rotate %17 by %c8_i32 dim 1 : vector<128x128xf32>, i32 -> vector<128x128xf32>
    %19 = arith.maximumf %17, %18 : vector<128x128xf32>
    %c16_i32 = arith.constant 16 : i32
    %20 = tpu.dynamic_rotate %19 by %c16_i32 dim 1 : vector<128x128xf32>, i32 -> vector<128x128xf32>
    %21 = arith.maximumf %19, %20 : vector<128x128xf32>
    %c32_i32 = arith.constant 32 : i32
    %22 = tpu.dynamic_rotate %21 by %c32_i32 dim 1 : vector<128x128xf32>, i32 -> vector<128x128xf32>
    %23 = arith.maximumf %21, %22 : vector<128x128xf32>
    %c64_i32 = arith.constant 64 : i32
    %24 = tpu.dynamic_rotate %23 by %c64_i32 dim 1 : vector<128x128xf32>, i32 -> vector<128x128xf32>
    %25 = arith.maximumf %23, %24 : vector<128x128xf32>
    %cst_12 = arith.constant 0xFF800000 : f32
    %26 = vector.broadcast %cst_12 : f32 to vector<128x128xf32>
    %27 = arith.cmpf oeq, %25, %26 : vector<128x128xf32>
    %cst_13 = arith.constant 0.000000e+00 : f32
    %28 = vector.broadcast %cst_13 : f32 to vector<128x128xf32>
    %29 = arith.select %27, %28, %25 : vector<128x128xi1>, vector<128x128xf32>
    %30 = arith.subf %17, %29 : vector<128x128xf32>
    %31 = math.exp %30 : vector<128x128xf32>
    %c8_i32_14 = arith.constant 8 : i32
    %32 = tpu.dynamic_rotate %31 by %c8_i32_14 dim 1 : vector<128x128xf32>, i32 -> vector<128x128xf32>
    %33 = arith.addf %31, %32 : vector<128x128xf32>
    %c16_i32_15 = arith.constant 16 : i32
    %34 = tpu.dynamic_rotate %33 by %c16_i32_15 dim 1 : vector<128x128xf32>, i32 -> vector<128x128xf32>
    %35 = arith.addf %33, %34 : vector<128x128xf32>
    %c32_i32_16 = arith.constant 32 : i32
    %36 = tpu.dynamic_rotate %35 by %c32_i32_16 dim 1 : vector<128x128xf32>, i32 -> vector<128x128xf32>
    %37 = arith.addf %35, %36 : vector<128x128xf32>
    %c64_i32_17 = arith.constant 64 : i32
    %38 = tpu.dynamic_rotate %37 by %c64_i32_17 dim 1 : vector<128x128xf32>, i32 -> vector<128x128xf32>
    %39 = arith.addf %37, %38 : vector<128x128xf32>
    %cst_18 = arith.constant 0.000000e+00 : f32
    %40 = vector.broadcast %cst_18 : f32 to vector<128x128xf32>
    %41 = arith.cmpf ogt, %39, %40 : vector<128x128xf32>
    %cst_19 = arith.constant 1.000000e+00 : f32
    %42 = vector.broadcast %cst_19 : f32 to vector<128x128xf32>
    %43 = arith.select %41, %39, %42 : vector<128x128xi1>, vector<128x128xf32>
    %44 = tpu.reciprocal %43 : vector<128x128xf32> -> vector<128x128xf32>
    %45 = arith.mulf %31, %44 : vector<128x128xf32>
    %c0_20 = arith.constant 0 : index
    %c0_21 = arith.constant 0 : index
    %46 = vector.load %arg6[%c0_20, %c0_21] : memref<128x16xf32, #tpu.memory_space<vmem>>, vector<128x16xf32>
    %c0_22 = arith.constant 0 : index
    %c0_23 = arith.constant 0 : index
    %47 = vector.load %arg7[%c0_22, %c0_23] : memref<128x32xf32, #tpu.memory_space<vmem>>, vector<128x32xf32>
    %48 = vector.extract_strided_slice %5 {offsets = [0, 0], sizes = [16, 32], strides = [1, 1]} : vector<128x32xf32> to vector<16x32xf32>
    %cst_24 = arith.constant dense<0.000000e+00> : vector<128x32xf32>
    %49 = tpu.matmul %46, %48, %cst_24 {dimension_numbers = #tpu.dot_dimension_numbers<[1], [0], [0], [1], [0, 0, 1, 1], [], []>} : vector<128x16xf32>, vector<16x32xf32>, vector<128x32xf32> -> vector<128x32xf32>
    %50 = arith.mulf %49, %47 : vector<128x32xf32>
    %51 = vector.extract_strided_slice %45 {offsets = [0, 0], sizes = [16, 128], strides = [1, 1]} : vector<128x128xf32> to vector<16x128xf32>
    %cst_25 = arith.constant dense<0.000000e+00> : vector<16x32xf32>
    %52 = tpu.matmul %51, %50, %cst_25 {dimension_numbers = #tpu.dot_dimension_numbers<[1], [0], [0], [1], [0, 0, 1, 1], [], []>} : vector<16x128xf32>, vector<128x32xf32>, vector<16x32xf32> -> vector<16x32xf32>
    %53 = vector.extract_strided_slice %5 {offsets = [16, 0], sizes = [16, 32], strides = [1, 1]} : vector<128x32xf32> to vector<16x32xf32>
    %cst_26 = arith.constant dense<0.000000e+00> : vector<128x32xf32>
    %54 = tpu.matmul %46, %53, %cst_26 {dimension_numbers = #tpu.dot_dimension_numbers<[1], [0], [0], [1], [0, 0, 1, 1], [], []>} : vector<128x16xf32>, vector<16x32xf32>, vector<128x32xf32> -> vector<128x32xf32>
    %55 = arith.mulf %54, %47 : vector<128x32xf32>
    %56 = vector.extract_strided_slice %45 {offsets = [16, 0], sizes = [16, 128], strides = [1, 1]} : vector<128x128xf32> to vector<16x128xf32>
    %cst_27 = arith.constant dense<0.000000e+00> : vector<16x32xf32>
    %57 = tpu.matmul %56, %55, %cst_27 {dimension_numbers = #tpu.dot_dimension_numbers<[1], [0], [0], [1], [0, 0, 1, 1], [], []>} : vector<16x128xf32>, vector<128x32xf32>, vector<16x32xf32> -> vector<16x32xf32>
    %58 = vector.extract_strided_slice %5 {offsets = [32, 0], sizes = [16, 32], strides = [1, 1]} : vector<128x32xf32> to vector<16x32xf32>
    %cst_28 = arith.constant dense<0.000000e+00> : vector<128x32xf32>
    %59 = tpu.matmul %46, %58, %cst_28 {dimension_numbers = #tpu.dot_dimension_numbers<[1], [0], [0], [1], [0, 0, 1, 1], [], []>} : vector<128x16xf32>, vector<16x32xf32>, vector<128x32xf32> -> vector<128x32xf32>
    %60 = arith.mulf %59, %47 : vector<128x32xf32>
    %61 = vector.extract_strided_slice %45 {offsets = [32, 0], sizes = [16, 128], strides = [1, 1]} : vector<128x128xf32> to vector<16x128xf32>
    %cst_29 = arith.constant dense<0.000000e+00> : vector<16x32xf32>
    %62 = tpu.matmul %61, %60, %cst_29 {dimension_numbers = #tpu.dot_dimension_numbers<[1], [0], [0], [1], [0, 0, 1, 1], [], []>} : vector<16x128xf32>, vector<128x32xf32>, vector<16x32xf32> -> vector<16x32xf32>
    %63 = vector.extract_strided_slice %5 {offsets = [48, 0], sizes = [16, 32], strides = [1, 1]} : vector<128x32xf32> to vector<16x32xf32>
    %cst_30 = arith.constant dense<0.000000e+00> : vector<128x32xf32>
    %64 = tpu.matmul %46, %63, %cst_30 {dimension_numbers = #tpu.dot_dimension_numbers<[1], [0], [0], [1], [0, 0, 1, 1], [], []>} : vector<128x16xf32>, vector<16x32xf32>, vector<128x32xf32> -> vector<128x32xf32>
    %65 = arith.mulf %64, %47 : vector<128x32xf32>
    %66 = vector.extract_strided_slice %45 {offsets = [48, 0], sizes = [16, 128], strides = [1, 1]} : vector<128x128xf32> to vector<16x128xf32>
    %cst_31 = arith.constant dense<0.000000e+00> : vector<16x32xf32>
    %67 = tpu.matmul %66, %65, %cst_31 {dimension_numbers = #tpu.dot_dimension_numbers<[1], [0], [0], [1], [0, 0, 1, 1], [], []>} : vector<16x128xf32>, vector<128x32xf32>, vector<16x32xf32> -> vector<16x32xf32>
    %68 = vector.extract_strided_slice %5 {offsets = [64, 0], sizes = [16, 32], strides = [1, 1]} : vector<128x32xf32> to vector<16x32xf32>
    %cst_32 = arith.constant dense<0.000000e+00> : vector<128x32xf32>
    %69 = tpu.matmul %46, %68, %cst_32 {dimension_numbers = #tpu.dot_dimension_numbers<[1], [0], [0], [1], [0, 0, 1, 1], [], []>} : vector<128x16xf32>, vector<16x32xf32>, vector<128x32xf32> -> vector<128x32xf32>
    %70 = arith.mulf %69, %47 : vector<128x32xf32>
    %71 = vector.extract_strided_slice %45 {offsets = [64, 0], sizes = [16, 128], strides = [1, 1]} : vector<128x128xf32> to vector<16x128xf32>
    %cst_33 = arith.constant dense<0.000000e+00> : vector<16x32xf32>
    %72 = tpu.matmul %71, %70, %cst_33 {dimension_numbers = #tpu.dot_dimension_numbers<[1], [0], [0], [1], [0, 0, 1, 1], [], []>} : vector<16x128xf32>, vector<128x32xf32>, vector<16x32xf32> -> vector<16x32xf32>
    %73 = vector.extract_strided_slice %5 {offsets = [80, 0], sizes = [16, 32], strides = [1, 1]} : vector<128x32xf32> to vector<16x32xf32>
    %cst_34 = arith.constant dense<0.000000e+00> : vector<128x32xf32>
    %74 = tpu.matmul %46, %73, %cst_34 {dimension_numbers = #tpu.dot_dimension_numbers<[1], [0], [0], [1], [0, 0, 1, 1], [], []>} : vector<128x16xf32>, vector<16x32xf32>, vector<128x32xf32> -> vector<128x32xf32>
    %75 = arith.mulf %74, %47 : vector<128x32xf32>
    %76 = vector.extract_strided_slice %45 {offsets = [80, 0], sizes = [16, 128], strides = [1, 1]} : vector<128x128xf32> to vector<16x128xf32>
    %cst_35 = arith.constant dense<0.000000e+00> : vector<16x32xf32>
    %77 = tpu.matmul %76, %75, %cst_35 {dimension_numbers = #tpu.dot_dimension_numbers<[1], [0], [0], [1], [0, 0, 1, 1], [], []>} : vector<16x128xf32>, vector<128x32xf32>, vector<16x32xf32> -> vector<16x32xf32>
    %78 = vector.extract_strided_slice %5 {offsets = [96, 0], sizes = [16, 32], strides = [1, 1]} : vector<128x32xf32> to vector<16x32xf32>
    %cst_36 = arith.constant dense<0.000000e+00> : vector<128x32xf32>
    %79 = tpu.matmul %46, %78, %cst_36 {dimension_numbers = #tpu.dot_dimension_numbers<[1], [0], [0], [1], [0, 0, 1, 1], [], []>} : vector<128x16xf32>, vector<16x32xf32>, vector<128x32xf32> -> vector<128x32xf32>
    %80 = arith.mulf %79, %47 : vector<128x32xf32>
    %81 = vector.extract_strided_slice %45 {offsets = [96, 0], sizes = [16, 128], strides = [1, 1]} : vector<128x128xf32> to vector<16x128xf32>
    %cst_37 = arith.constant dense<0.000000e+00> : vector<16x32xf32>
    %82 = tpu.matmul %81, %80, %cst_37 {dimension_numbers = #tpu.dot_dimension_numbers<[1], [0], [0], [1], [0, 0, 1, 1], [], []>} : vector<16x128xf32>, vector<128x32xf32>, vector<16x32xf32> -> vector<16x32xf32>
    %83 = vector.extract_strided_slice %5 {offsets = [112, 0], sizes = [16, 32], strides = [1, 1]} : vector<128x32xf32> to vector<16x32xf32>
    %cst_38 = arith.constant dense<0.000000e+00> : vector<128x32xf32>
    %84 = tpu.matmul %46, %83, %cst_38 {dimension_numbers = #tpu.dot_dimension_numbers<[1], [0], [0], [1], [0, 0, 1, 1], [], []>} : vector<128x16xf32>, vector<16x32xf32>, vector<128x32xf32> -> vector<128x32xf32>
    %85 = arith.mulf %84, %47 : vector<128x32xf32>
    %86 = vector.extract_strided_slice %45 {offsets = [112, 0], sizes = [16, 128], strides = [1, 1]} : vector<128x128xf32> to vector<16x128xf32>
    %cst_39 = arith.constant dense<0.000000e+00> : vector<16x32xf32>
    %87 = tpu.matmul %86, %85, %cst_39 {dimension_numbers = #tpu.dot_dimension_numbers<[1], [0], [0], [1], [0, 0, 1, 1], [], []>} : vector<16x128xf32>, vector<128x32xf32>, vector<16x32xf32> -> vector<16x32xf32>
    %88 = tpu.concatenate %52, %57, %62, %67, %72, %77, %82, %87 in 0 : vector<16x32xf32>, vector<16x32xf32>, vector<16x32xf32>, vector<16x32xf32>, vector<16x32xf32>, vector<16x32xf32>, vector<16x32xf32>, vector<16x32xf32> -> vector<128x32xf32>
    %89 = arith.addf %0, %88 : vector<128x32xf32>
    %c0_40 = arith.constant 0 : index
    %c0_41 = arith.constant 0 : index
    %90 = vector.load %arg8[%c0_40, %c0_41] : memref<128x32xf32, #tpu.memory_space<vmem>>, vector<128x32xf32>
    tpu.vector_store %arg8[%c0_40, %c0_41], %89 {strides = array<i32>} : memref<128x32xf32, #tpu.memory_space<vmem>>, vector<128x32xf32>,
    return
  }
  func.func @transform_0(%arg0: i32) -> (i32, i32) {
    %c0_i32 = arith.constant 0 : i32
    %c0_i32_0 = arith.constant 0 : i32
    return %arg0, %c0_i32 : i32, i32
  }
  func.func @transform_1(%arg0: i32) -> (i32, i32) {
    %c0_i32 = arith.constant 0 : i32
    %c0_i32_0 = arith.constant 0 : i32
    return %arg0, %c0_i32 : i32, i32
  }
  func.func @transform_2(%arg0: i32) -> (i32, i32) {
    %c0_i32 = arith.constant 0 : i32
    %c0_i32_0 = arith.constant 0 : i32
    %c0_i32_1 = arith.constant 0 : i32
    return %c0_i32, %c0_i32_0 : i32, i32
  }
  func.func @transform_3(%arg0: i32) -> (i32, i32) {
    %c0_i32 = arith.constant 0 : i32
    %c0_i32_0 = arith.constant 0 : i32
    %c0_i32_1 = arith.constant 0 : i32
    return %c0_i32, %c0_i32_0 : i32, i32
  }
  func.func @transform_4(%arg0: i32) -> (i32, i32) {
    %c0_i32 = arith.constant 0 : i32
    %c0_i32_0 = arith.constant 0 : i32
    %c0_i32_1 = arith.constant 0 : i32
    return %c0_i32, %c0_i32_0 : i32, i32
  }
  func.func @transform_5(%arg0: i32) -> (i32, i32) {
    %c0_i32 = arith.constant 0 : i32
    %c0_i32_0 = arith.constant 0 : i32
    %c0_i32_1 = arith.constant 0 : i32
    return %c0_i32, %c0_i32_0 : i32, i32
  }
  func.func @transform_6(%arg0: i32) -> (i32, i32) {
    %c0_i32 = arith.constant 0 : i32
    %c0_i32_0 = arith.constant 0 : i32
    %c0_i32_1 = arith.constant 0 : i32
    return %c0_i32, %c0_i32_0 : i32, i32
  }
  func.func @transform_7(%arg0: i32) -> (i32, i32) {
    %c0_i32 = arith.constant 0 : i32
    %c0_i32_0 = arith.constant 0 : i32
    return %arg0, %c0_i32 : i32, i32
  }
}

</mosaic_0001>

<llo_original>
// kernel: tpu_custom_call.1
$region0: #{tpu_custom_call.1}
  #allocation0 [shape = 'u32[]', space=smem, size = 0x4, offset = 0x4, fixed_abs, tag = 'smem constant byte address 0x4 - core index']
  #allocation1 [shape = 'u32[72,128]{1,0:T(1,128)}', space=vmem, size = 0x9000, scoped, tag = 'internal scratch']
  %s0 = inlined_call_operand.vmem [shape: f32[256,32], index: 0, kind: input, shape index: {}]
  %s1 = inlined_call_operand.vmem [shape: f32[256,128], index: 1, kind: input, shape index: {}]
  %s2 = inlined_call_operand.hbm [shape: f32[32,288], index: 2, kind: input, shape index: {}]
  %s3 = inlined_call_operand.vmem [shape: f32[128,128], index: 3, kind: input, shape index: {}]
  %s4 = inlined_call_operand.vmem [shape: f32[128,128], index: 4, kind: input, shape index: {}]
  %s5 = inlined_call_operand.vmem [shape: f32[128,16], index: 5, kind: input, shape index: {}]
  %s6 = inlined_call_operand.vmem [shape: f32[128,32], index: 6, kind: input, shape index: {}]
  %s7 = inlined_call_operand.vmem [shape: f32[256,32], index: 7, kind: output, shape index: {}]
  %s8 = sld [smem:[#allocation0]]
  $region65: #{tpu_custom_call.1} parent=0
    _
  %s10 = ssub.s32 1, %s8
  %s11 = scalar_select 0, %s10, %s8
  $region1: #{tpu_custom_call.1} parent=0
    #allocation2 [shape = 'u8[49152]{0}', space=vmem, size = 0xc000, scoped, tag = 'input window, operand 2, single buffered']
    #allocation3 [shape = 's32[2]{0}', space=sflag, size = 0x8, scoped, tag = 'scoped memory for tpu_custom_call.1']
    %12 = vsyncpa [#allocation3], 0
    loop: start=0, step=1, limit=4
    $region2: #{tpu_custom_call.1} parent=1 // loop_pre_header
      _
    $region3: #{tpu_custom_call.1} parent=1 // loop_header
      %s14 = sphi 0, %s18
      %p15 = scmp.ge.s32.totalorder %s14, 4
      %s24 = sphi 0, %s26
      %s27 = sphi 0, %s24
      %s28 = sphi 0, %s27
      %s44 = sphi 0, %s28
      %s50 = sphi 0, %s52
      %s53 = sphi 0, %s50
      %s54 = sphi 0, %s53
      %s70 = sphi 0, %s54
      %s74 = sphi 0, %s74
      %s76 = sphi 0, %s74
      %s77 = sphi 0, %s76
      %s91 = sphi 0, %s77
      %s95 = sphi 0, %s95
      %s97 = sphi 0, %s95
      %s98 = sphi 0, %s97
      %s112 = sphi 0, %s98
      %s116 = sphi 0, %s116
      %s118 = sphi 0, %s116
      %s119 = sphi 0, %s118
      %s133 = sphi 0, %s119
      %s137 = sphi 0, %s137
      %s139 = sphi 0, %s137
      %s140 = sphi 0, %s139
      %s154 = sphi 0, %s140
      %s158 = sphi 0, %s158
      %s160 = sphi 0, %s158
      %s161 = sphi 0, %s160
      %s175 = sphi 0, %s161
      %s181 = sphi 0, %s183
      %s184 = sphi 0, %s181
      %s185 = sphi 0, %s184
      %s201 = sphi 0, %s185
    $region4: #{tpu_custom_call.1} parent=1 // loop_header_branch
      %17 = sbr.rel (%p15) target = $region8
    $region5: #{tpu_custom_call.1} parent=1 // loop_body
      %s19 = ssub.s32 %s14, 1
      %s20 = ssub.s32 %s14, 2
      %s21 = sadd.s32 %s14, 1
      %s22 = ssub.s32 %s14, %s21
      %p23 = scmp.eq.s32.totalorder %s22, 0
      %s25 = sadd.s32 %s24, 1
      %s26 = scalar_select %p23, %s24, %s25
      %p29 = pneg %p23
      %p30 = scmp.eq.s32.totalorder %s14, 1
      %p31 = por %p29, %p30
      %p32 = scmp.ne.s32.totalorder %s24, %s27
      %p33 = scmp.eq.s32.totalorder %s14, 0
      %p34 = por %p32, %p33
      %p35 = scmp.ne.s32.totalorder %s24, %s27
      %p36 = scmp.eq.s32.totalorder %s19, 1
      %p37 = por %p35, %p36
      %p38 = scmp.ne.s32.totalorder %s27, %s28
      %p39 = scmp.eq.s32.totalorder %s19, 0
      %p40 = por %p38, %p39
      %p41 = scmp.ne.s32.totalorder %s27, %s28
      %p42 = scmp.eq.s32.totalorder %s20, 1
      %p43 = por %p41, %p42
      %p45 = scmp.ne.s32.totalorder %s28, %s44
      %p46 = scmp.eq.s32.totalorder %s20, 0
      %p47 = por %p45, %p46
      %s48 = ssub.s32 %s14, %s21
      %p49 = scmp.eq.s32.totalorder %s48, 0
      %s51 = sadd.s32 %s50, 1
      %s52 = scalar_select %p49, %s50, %s51
      %p55 = pneg %p49
      %p56 = scmp.eq.s32.totalorder %s14, 1
      %p57 = por %p55, %p56
      %p58 = scmp.ne.s32.totalorder %s50, %s53
      %p59 = scmp.eq.s32.totalorder %s14, 0
      %p60 = por %p58, %p59
      %p61 = scmp.ne.s32.totalorder %s50, %s53
      %p62 = scmp.eq.s32.totalorder %s19, 1
      %p63 = por %p61, %p62
      %p64 = scmp.ne.s32.totalorder %s53, %s54
      %p65 = scmp.eq.s32.totalorder %s19, 0
      %p66 = por %p64, %p65
      %p67 = scmp.ne.s32.totalorder %s53, %s54
      %p68 = scmp.eq.s32.totalorder %s20, 1
      %p69 = por %p67, %p68
      %p71 = scmp.ne.s32.totalorder %s54, %s70
      %p72 = scmp.eq.s32.totalorder %s20, 0
      %p73 = por %p71, %p72
      %s75 = sadd.s32 %s74, 1
      %p78 = scmp.eq.s32.totalorder %s14, 1
      %p79 = scmp.ne.s32.totalorder %s74, %s76
      %p80 = scmp.eq.s32.totalorder %s14, 0
      %p81 = por %p79, %p80
      %p82 = scmp.ne.s32.totalorder %s74, %s76
      %p83 = scmp.eq.s32.totalorder %s19, 1
      %p84 = por %p82, %p83
      %p85 = scmp.ne.s32.totalorder %s76, %s77
      %p86 = scmp.eq.s32.totalorder %s19, 0
      %p87 = por %p85, %p86
      %p88 = scmp.ne.s32.totalorder %s76, %s77
      %p89 = scmp.eq.s32.totalorder %s20, 1
      %p90 = por %p88, %p89
      %p92 = scmp.ne.s32.totalorder %s77, %s91
      %p93 = scmp.eq.s32.totalorder %s20, 0
      %p94 = por %p92, %p93
      %s96 = sadd.s32 %s95, 1
      %p99 = scmp.eq.s32.totalorder %s14, 1
      %p100 = scmp.ne.s32.totalorder %s95, %s97
      %p101 = scmp.eq.s32.totalorder %s14, 0
      %p102 = por %p100, %p101
      %p103 = scmp.ne.s32.totalorder %s95, %s97
      %p104 = scmp.eq.s32.totalorder %s19, 1
      %p105 = por %p103, %p104
      %p106 = scmp.ne.s32.totalorder %s97, %s98
      %p107 = scmp.eq.s32.totalorder %s19, 0
      %p108 = por %p106, %p107
      %p109 = scmp.ne.s32.totalorder %s97, %s98
      %p110 = scmp.eq.s32.totalorder %s20, 1
      %p111 = por %p109, %p110
      %p113 = scmp.ne.s32.totalorder %s98, %s112
      %p114 = scmp.eq.s32.totalorder %s20, 0
      %p115 = por %p113, %p114
      %s117 = sadd.s32 %s116, 1
      %p120 = scmp.eq.s32.totalorder %s14, 1
      %p121 = scmp.ne.s32.totalorder %s116, %s118
      %p122 = scmp.eq.s32.totalorder %s14, 0
      %p123 = por %p121, %p122
      %p124 = scmp.ne.s32.totalorder %s116, %s118
      %p125 = scmp.eq.s32.totalorder %s19, 1
      %p126 = por %p124, %p125
      %p127 = scmp.ne.s32.totalorder %s118, %s119
      %p128 = scmp.eq.s32.totalorder %s19, 0
      %p129 = por %p127, %p128
      %p130 = scmp.ne.s32.totalorder %s118, %s119
      %p131 = scmp.eq.s32.totalorder %s20, 1
      %p132 = por %p130, %p131
      %p134 = scmp.ne.s32.totalorder %s119, %s133
      %p135 = scmp.eq.s32.totalorder %s20, 0
      %p136 = por %p134, %p135
      %s138 = sadd.s32 %s137, 1
      %p141 = scmp.eq.s32.totalorder %s14, 1
      %p142 = scmp.ne.s32.totalorder %s137, %s139
      %p143 = scmp.eq.s32.totalorder %s14, 0
      %p144 = por %p142, %p143
      %p145 = scmp.ne.s32.totalorder %s137, %s139
      %p146 = scmp.eq.s32.totalorder %s19, 1
      %p147 = por %p145, %p146
      %p148 = scmp.ne.s32.totalorder %s139, %s140
      %p149 = scmp.eq.s32.totalorder %s19, 0
      %p150 = por %p148, %p149
      %p151 = scmp.ne.s32.totalorder %s139, %s140
      %p152 = scmp.eq.s32.totalorder %s20, 1
      %p153 = por %p151, %p152
      %p155 = scmp.ne.s32.totalorder %s140, %s154
      %p156 = scmp.eq.s32.totalorder %s20, 0
      %p157 = por %p155, %p156
      %s159 = sadd.s32 %s158, 1
      %p162 = scmp.eq.s32.totalorder %s14, 1
      %p163 = scmp.ne.s32.totalorder %s158, %s160
      %p164 = scmp.eq.s32.totalorder %s14, 0
      %p165 = por %p163, %p164
      %p166 = scmp.ne.s32.totalorder %s158, %s160
      %p167 = scmp.eq.s32.totalorder %s19, 1
      %p168 = por %p166, %p167
      %p169 = scmp.ne.s32.totalorder %s160, %s161
      %p170 = scmp.eq.s32.totalorder %s19, 0
      %p171 = por %p169, %p170
      %p172 = scmp.ne.s32.totalorder %s160, %s161
      %p173 = scmp.eq.s32.totalorder %s20, 1
      %p174 = por %p172, %p173
      %p176 = scmp.ne.s32.totalorder %s161, %s175
      %p177 = scmp.eq.s32.totalorder %s20, 0
      %p178 = por %p176, %p177
      %s179 = ssub.s32 %s14, %s21
      %p180 = scmp.eq.s32.totalorder %s179, 0
      %s182 = sadd.s32 %s181, 1
      %s183 = scalar_select %p180, %s181, %s182
      %p186 = pneg %p180
      %p187 = scmp.eq.s32.totalorder %s14, 1
      %p188 = por %p186, %p187
      %p189 = scmp.ne.s32.totalorder %s181, %s184
      %p190 = scmp.eq.s32.totalorder %s14, 0
      %p191 = por %p189, %p190
      %p192 = scmp.ne.s32.totalorder %s181, %s184
      %p193 = scmp.eq.s32.totalorder %s19, 1
      %p194 = por %p192, %p193
      %p195 = scmp.ne.s32.totalorder %s184, %s185
      %p196 = scmp.eq.s32.totalorder %s19, 0
      %p197 = por %p195, %p196
      %p198 = scmp.ne.s32.totalorder %s184, %s185
      %p199 = scmp.eq.s32.totalorder %s20, 1
      %p200 = por %p198, %p199
      %p202 = scmp.ne.s32.totalorder %s185, %s201
      %p203 = scmp.eq.s32.totalorder %s20, 0
      %p204 = por %p202, %p203
      %p205 = scmp.le.s32.totalorder 1, %s14
      %p206 = scmp.lt.s32.totalorder %s14, 3
      %p207 = pnand %p205, %p206
      %p208 = pneg %p207
      // Predicated region
      $region9: #{tpu_custom_call.1} parent=5 // pred_check
        _
      $region10: #{tpu_custom_call.1} parent=5 // pred_check_branch
        %210 = sbr.rel (%p207) target = $region12
      $region11: #{tpu_custom_call.1} parent=5 // pred_region
        %s211 = ssub.s32 %s14, 1
        // Predicated region
        $region13: #{tpu_custom_call.1} parent=11 // pred_check
          %p212 = pneg %p87
        $region14: #{tpu_custom_call.1} parent=11 // pred_check_branch
          %214 = sbr.rel (%p212) target = $region16
        $region15: #{tpu_custom_call.1} parent=11 // pred_region
          %216 = vsyncadd [#allocation3], 0
          %s217 = sshll.u32 %s2, 4
          %s218 = int_to_ptr.hbm [resolvable:$true] %s217
          %s219 = sshll.u32 [#allocation2], 4
          %s220 = int_to_ptr.vmem [resolvable:$true] %s219
          %225 = dma.hbm_to_vmem [thread:$0]  %s218, 1536, %s220, [#allocation3], 384, 384, 24
        $region16: #{tpu_custom_call.1} parent=11 // pred_fallthru
          _
        // Predicated region
        $region17: #{tpu_custom_call.1} parent=11 // pred_check
          %p226 = pneg %p108
        $region18: #{tpu_custom_call.1} parent=11 // pred_check_branch
          %228 = sbr.rel (%p226) target = $region20
        $region19: #{tpu_custom_call.1} parent=11 // pred_region
          _
        $region20: #{tpu_custom_call.1} parent=11 // pred_fallthru
          _
        // Predicated region
        $region21: #{tpu_custom_call.1} parent=11 // pred_check
          %p229 = pneg %p129
        $region22: #{tpu_custom_call.1} parent=11 // pred_check_branch
          %231 = sbr.rel (%p229) target = $region24
        $region23: #{tpu_custom_call.1} parent=11 // pred_region
          _
        $region24: #{tpu_custom_call.1} parent=11 // pred_fallthru
          _
        // Predicated region
        $region25: #{tpu_custom_call.1} parent=11 // pred_check
          %p232 = pneg %p150
        $region26: #{tpu_custom_call.1} parent=11 // pred_check_branch
          %234 = sbr.rel (%p232) target = $region28
        $region27: #{tpu_custom_call.1} parent=11 // pred_region
          _
        $region28: #{tpu_custom_call.1} parent=11 // pred_fallthru
          _
        // Predicated region
        $region29: #{tpu_custom_call.1} parent=11 // pred_check
          %p235 = pneg %p171
        $region30: #{tpu_custom_call.1} parent=11 // pred_check_branch
          %237 = sbr.rel (%p235) target = $region32
        $region31: #{tpu_custom_call.1} parent=11 // pred_region
          _
        $region32: #{tpu_custom_call.1} parent=11 // pred_fallthru
          _
      $region12: #{tpu_custom_call.1} parent=5 // pred_fallthru
        _
      %p238 = scmp.lt.s32.totalorder %s14, 2
      // Predicated region
      $region33: #{tpu_custom_call.1} parent=5 // pred_check
        %p239 = pneg %p238
      $region34: #{tpu_custom_call.1} parent=5 // pred_check_branch
        %241 = sbr.rel (%p239) target = $region36
      $region35: #{tpu_custom_call.1} parent=5 // pred_region
        // Predicated region
        $region37: #{tpu_custom_call.1} parent=35 // pred_check
          %p242 = pneg %p34
        $region38: #{tpu_custom_call.1} parent=35 // pred_check_branch
          %244 = sbr.rel (%p242) target = $region40
        $region39: #{tpu_custom_call.1} parent=35 // pred_region
          %s245 = smul.u32 16, %s14
          %p246 = scmp.lt.s32.totalorder %s245, 31
          %s247 = scalar_select %p246, %s245, 31
          %s248 = smul.addr %s247, 8
          %s249 = scalar_lea.vmem %s0, %s248
          %s250 = smul.u32 16, %s14
        $region40: #{tpu_custom_call.1} parent=35 // pred_fallthru
          _
        // Predicated region
        $region41: #{tpu_custom_call.1} parent=35 // pred_check
          %p251 = pneg %p60
        $region42: #{tpu_custom_call.1} parent=35 // pred_check_branch
          %253 = sbr.rel (%p251) target = $region44
        $region43: #{tpu_custom_call.1} parent=35 // pred_region
          %s254 = smul.u32 16, %s14
          %p255 = scmp.lt.s32.totalorder %s254, 31
          %s256 = scalar_select %p255, %s254, 31
          %s257 = smul.addr %s256, 8
          %s258 = scalar_lea.vmem %s1, %s257
          %s259 = smul.u32 16, %s14
        $region44: #{tpu_custom_call.1} parent=35 // pred_fallthru
          _
      $region36: #{tpu_custom_call.1} parent=5 // pred_fallthru
        _
      %p260 = scmp.le.s32.totalorder 1, %s14
      %p261 = scmp.lt.s32.totalorder %s14, 3
      %p262 = pnand %p260, %p261
      %p263 = pneg %p262
      // Predicated region
      $region45: #{tpu_custom_call.1} parent=5 // pred_check
        _
      $region46: #{tpu_custom_call.1} parent=5 // pred_check_branch
        %265 = sbr.rel (%p262) target = $region48
      $region47: #{tpu_custom_call.1} parent=5 // pred_region
        %s266 = ssub.s32 %s14, 1
        // Predicated region
        $region49: #{tpu_custom_call.1} parent=47 // pred_check
          %p267 = pneg %p87
        $region50: #{tpu_custom_call.1} parent=47 // pred_check_branch
          %269 = sbr.rel (%p267) target = $region52
        $region51: #{tpu_custom_call.1} parent=47 // pred_region
          %271 = dma.done [#allocation3], 1536
        $region52: #{tpu_custom_call.1} parent=47 // pred_fallthru
          _
        %s272 = smul.u32 16, %s19
        %p273 = scmp.lt.s32.totalorder %s272, 31
        %s274 = scalar_select %p273, %s272, 31
        %s275 = smul.addr %s274, 8
        %s276 = scalar_lea.vmem %s0, %s275
        %p277 = pneg %p40
        %p278 = pneg %p37
        %s279 = smul.u32 16, %s19
        %p280 = scmp.lt.s32.totalorder %s279, 31
        %s281 = scalar_select %p280, %s279, 31
        %s282 = smul.addr %s281, 8
        %s283 = scalar_lea.vmem %s1, %s282
        %p284 = pneg %p66
        %p285 = pneg %p63
        %p286 = pneg %p87
        %p287 = pneg %p84
        %p288 = pneg %p108
        %p289 = pneg %p105
        %p290 = pneg %p129
        %p291 = pneg %p126
        %p292 = pneg %p150
        %p293 = pneg %p147
        %p294 = pneg %p171
        %p295 = pneg %p168
        %p296 = pneg %p197
        %p297 = pneg %p194
        %s298 = smul.u32 16, %s19
        %p299 = scmp.lt.s32.totalorder %s298, 31
        %s300 = scalar_select %p299, %s298, 31
        %s301 = smul.addr %s300, 8
        %s302 = scalar_lea.vmem %s7, %s301
        %s303 = smul.u32 16, %s19
        %p304 = scmp.lt.s32.totalorder %s303, 31
        %s305 = scalar_select %p304, %s303, 31
        %s306 = smul.addr %s305, 8
        %s307 = scalar_lea.vmem %s0, %s306
        %s308 = smul.u32 16, %s19
        %s309 = smul.u32 16, %s19
        %p310 = scmp.lt.s32.totalorder %s309, 31
        %s311 = scalar_select %p310, %s309, 31
        %s312 = smul.addr %s311, 8
        %s313 = scalar_lea.vmem %s1, %s312
        %s314 = smul.u32 16, %s19
        %s315 = smul.u32 16, %s19
        %p316 = scmp.lt.s32.totalorder %s315, 31
        %s317 = scalar_select %p316, %s315, 31
        %s318 = smul.addr %s317, 8
        %s319 = scalar_lea.vmem %s7, %s318
        %s320 = smul.u32 16, %s19
        %v321 = vld [vmem:[%s307] sm:$0xff]
        %v322 = vld [vmem:[%s307 + $0x8] sm:$0xff]
        %v323 = vld [vmem:[%s307 + $0x10] sm:$0xff]
        %v324 = vld [vmem:[%s307 + $0x18] sm:$0xff]
        %v325 = vld [vmem:[%s307 + $0x20] sm:$0xff]
        %v326 = vld [vmem:[%s307 + $0x28] sm:$0xff]
        %v327 = vld [vmem:[%s307 + $0x30] sm:$0xff]
        %v328 = vld [vmem:[%s307 + $0x38] sm:$0xff]
        %v329 = vld [vmem:[%s307 + $0x40] sm:$0xff]
        %v330 = vld [vmem:[%s307 + $0x48] sm:$0xff]
        %v331 = vld [vmem:[%s307 + $0x50] sm:$0xff]
        %v332 = vld [vmem:[%s307 + $0x58] sm:$0xff]
        %v333 = vld [vmem:[%s307 + $0x60] sm:$0xff]
        %v334 = vld [vmem:[%s307 + $0x68] sm:$0xff]
        %v335 = vld [vmem:[%s307 + $0x70] sm:$0xff]
        %v336 = vld [vmem:[%s307 + $0x78] sm:$0xff]
        %v337 = vld [vmem:[#allocation2] sm:$0xff]
        %v338 = vld [vmem:[#allocation2 + $0x8] sm:$0xff]
        %v339 = vld [vmem:[#allocation2 + $0x10] sm:$0xff]
        %v340 = vld [vmem:[#allocation2 + $0x18] sm:$0xff]
        %v341 = vld [vmem:[#allocation2 + $0x20] sm:$0xff]
        %v342 = vld [vmem:[#allocation2 + $0x28] sm:$0xff]
        %v343 = vld [vmem:[#allocation2 + $0x30] sm:$0xff]
        %v344 = vld [vmem:[#allocation2 + $0x38] sm:$0xff]
        %v345 = vld [vmem:[#allocation2 + $0x40] sm:$0xff]
        %v346 = vld [vmem:[#allocation2 + $0x48] sm:$0xff]
        %v347 = vld [vmem:[#allocation2 + $0x50] sm:$0xff]
        %v348 = vld [vmem:[#allocation2 + $0x58] sm:$0xff]
        %vm349 = vcmask 261120
        %v351 = vsel %vm349, %v321, 0
        %v354 = vsel %vm349, %v322, 0
        %v357 = vsel %vm349, %v323, 0
        %v360 = vsel %vm349, %v324, 0
        %v363 = vsel %vm349, %v325, 0
        %v366 = vsel %vm349, %v326, 0
        %v369 = vsel %vm349, %v327, 0
        %v372 = vsel %vm349, %v328, 0
        %v375 = vsel %vm349, %v329, 0
        %v378 = vsel %vm349, %v330, 0
        %v381 = vsel %vm349, %v331, 0
        %v384 = vsel %vm349, %v332, 0
        %v387 = vsel %vm349, %v333, 0
        %v390 = vsel %vm349, %v334, 0
        %v393 = vsel %vm349, %v335, 0
        %v396 = vsel %vm349, %v336, 0
        %398 = vmatpush.msra.mxu0 0.0
        %399 = vmatpush.msra.mxu0 0.0
        %400 = vmatpush.msra.mxu0 0.0
        %401 = vmatpush.msra.mxu0 0.0
        %402 = vmatpush.msra.mxu0 0.0
        %403 = vmatpush.msra.mxu0 0.0
        %404 = vmatpush.msra.mxu0 0.0
        %405 = vmatpush.msra.mxu0 0.0
        %406 = vmatpush.msra.mxu0 0.0
        %407 = vmatpush.msra.mxu0 0.0
        %408 = vmatpush.msra.mxu0 0.0
        %409 = vmatpush.msra.mxu0 0.0
        %410 = vmatpush.msra.mxu0 %v346
        %411 = vmatpush.msra.mxu0 %v343
        %412 = vmatpush.msra.mxu0 %v340
        %413 = vmatpush.msra.mxu0 %v337
        %414 = vmatmul.f32.gmra.mxu0 %v351
        %v415 = vpop.f32.mrf.mxu0
        %v416 = vadd.f32 0.0, %v415
        %417 = vmatmul.f32.gmra.mxu0 %v354
        %v418 = vpop.f32.mrf.mxu0
        %v419 = vadd.f32 0.0, %v418
        %420 = vmatmul.f32.gmra.mxu0 %v357
        %v421 = vpop.f32.mrf.mxu0
        %v422 = vadd.f32 0.0, %v421
        %423 = vmatmul.f32.gmra.mxu0 %v360
        %v424 = vpop.f32.mrf.mxu0
        %v425 = vadd.f32 0.0, %v424
        %426 = vmatmul.f32.gmra.mxu0 %v363
        %v427 = vpop.f32.mrf.mxu0
        %v428 = vadd.f32 0.0, %v427
        %429 = vmatmul.f32.gmra.mxu0 %v366
        %v430 = vpop.f32.mrf.mxu0
        %v431 = vadd.f32 0.0, %v430
        %432 = vmatmul.f32.gmra.mxu0 %v369
        %v433 = vpop.f32.mrf.mxu0
        %v434 = vadd.f32 0.0, %v433
        %435 = vmatmul.f32.gmra.mxu0 %v372
        %v436 = vpop.f32.mrf.mxu0
        %v437 = vadd.f32 0.0, %v436
        %438 = vmatmul.f32.gmra.mxu0 %v375
        %v439 = vpop.f32.mrf.mxu0
        %v440 = vadd.f32 0.0, %v439
        %441 = vmatmul.f32.gmra.mxu0 %v378
        %v442 = vpop.f32.mrf.mxu0
        %v443 = vadd.f32 0.0, %v442
        %444 = vmatmul.f32.gmra.mxu0 %v381
        %v445 = vpop.f32.mrf.mxu0
        %v446 = vadd.f32 0.0, %v445
        %447 = vmatmul.f32.gmra.mxu0 %v384
        %v448 = vpop.f32.mrf.mxu0
        %v449 = vadd.f32 0.0, %v448
        %450 = vmatmul.f32.gmra.mxu0 %v387
        %v451 = vpop.f32.mrf.mxu0
        %v452 = vadd.f32 0.0, %v451
        %453 = vmatmul.f32.gmra.mxu0 %v390
        %v454 = vpop.f32.mrf.mxu0
        %v455 = vadd.f32 0.0, %v454
        %456 = vmatmul.f32.gmra.mxu0 %v393
        %v457 = vpop.f32.mrf.mxu0
        %v458 = vadd.f32 0.0, %v457
        %459 = vmatmul.f32.gmra.mxu0 %v396
        %v460 = vpop.f32.mrf.mxu0
        %v461 = vadd.f32 0.0, %v460
        %462 = vdwg.mxu0
        %463 = vmatpush.msra.mxu0 0.0
        %464 = vmatpush.msra.mxu0 0.0
        %465 = vmatpush.msra.mxu0 0.0
        %466 = vmatpush.msra.mxu0 0.0
        %467 = vmatpush.msra.mxu0 0.0
        %468 = vmatpush.msra.mxu0 0.0
        %469 = vmatpush.msra.mxu0 0.0
        %470 = vmatpush.msra.mxu0 0.0
        %471 = vmatpush.msra.mxu0 0.0
        %472 = vmatpush.msra.mxu0 0.0
        %473 = vmatpush.msra.mxu0 0.0
        %474 = vmatpush.msra.mxu0 0.0
        %475 = vmatpush.msra.mxu0 %v347
        %476 = vmatpush.msra.mxu0 %v344
        %477 = vmatpush.msra.mxu0 %v341
        %478 = vmatpush.msra.mxu0 %v338
        %479 = vmatmul.f32.gmra.mxu0 %v351
        %v480 = vpop.f32.mrf.mxu0
        %v481 = vadd.f32 0.0, %v480
        %482 = vmatmul.f32.gmra.mxu0 %v354
        %v483 = vpop.f32.mrf.mxu0
        %v484 = vadd.f32 0.0, %v483
        %485 = vmatmul.f32.gmra.mxu0 %v357
        %v486 = vpop.f32.mrf.mxu0
        %v487 = vadd.f32 0.0, %v486
        %488 = vmatmul.f32.gmra.mxu0 %v360
        %v489 = vpop.f32.mrf.mxu0
        %v490 = vadd.f32 0.0, %v489
        %491 = vmatmul.f32.gmra.mxu0 %v363
        %v492 = vpop.f32.mrf.mxu0
        %v493 = vadd.f32 0.0, %v492
        %494 = vmatmul.f32.gmra.mxu0 %v366
        %v495 = vpop.f32.mrf.mxu0
        %v496 = vadd.f32 0.0, %v495
        %497 = vmatmul.f32.gmra.mxu0 %v369
        %v498 = vpop.f32.mrf.mxu0
        %v499 = vadd.f32 0.0, %v498
        %500 = vmatmul.f32.gmra.mxu0 %v372
        %v501 = vpop.f32.mrf.mxu0
        %v502 = vadd.f32 0.0, %v501
        %503 = vmatmul.f32.gmra.mxu0 %v375
        %v504 = vpop.f32.mrf.mxu0
        %v505 = vadd.f32 0.0, %v504
        %506 = vmatmul.f32.gmra.mxu0 %v378
        %v507 = vpop.f32.mrf.mxu0
        %v508 = vadd.f32 0.0, %v507
        %509 = vmatmul.f32.gmra.mxu0 %v381
        %v510 = vpop.f32.mrf.mxu0
        %v511 = vadd.f32 0.0, %v510
        %512 = vmatmul.f32.gmra.mxu0 %v384
        %v513 = vpop.f32.mrf.mxu0
        %v514 = vadd.f32 0.0, %v513
        %515 = vmatmul.f32.gmra.mxu0 %v387
        %v516 = vpop.f32.mrf.mxu0
        %v517 = vadd.f32 0.0, %v516
        %518 = vmatmul.f32.gmra.mxu0 %v390
        %v519 = vpop.f32.mrf.mxu0
        %v520 = vadd.f32 0.0, %v519
        %521 = vmatmul.f32.gmra.mxu0 %v393
        %v522 = vpop.f32.mrf.mxu0
        %v523 = vadd.f32 0.0, %v522
        %524 = vmatmul.f32.gmra.mxu0 %v396
        %v525 = vpop.f32.mrf.mxu0
        %v526 = vadd.f32 0.0, %v525
        %527 = vdwg.mxu0
        %528 = vmatpush.msra.mxu0 0.0
        %529 = vmatpush.msra.mxu0 0.0
        %530 = vmatpush.msra.mxu0 0.0
        %531 = vmatpush.msra.mxu0 0.0
        %532 = vmatpush.msra.mxu0 0.0
        %533 = vmatpush.msra.mxu0 0.0
        %534 = vmatpush.msra.mxu0 0.0
        %535 = vmatpush.msra.mxu0 0.0
        %536 = vmatpush.msra.mxu0 0.0
        %537 = vmatpush.msra.mxu0 0.0
        %538 = vmatpush.msra.mxu0 0.0
        %539 = vmatpush.msra.mxu0 0.0
        %540 = vmatpush.msra.mxu0 %v348
        %541 = vmatpush.msra.mxu0 %v345
        %542 = vmatpush.msra.mxu0 %v342
        %543 = vmatpush.msra.mxu0 %v339
        %544 = vmatmul.f32.gmra.mxu0 %v351
        %v545 = vpop.f32.mrf.mxu0
        %v546 = vadd.f32 0.0, %v545
        %547 = vmatmul.f32.gmra.mxu0 %v354
        %v548 = vpop.f32.mrf.mxu0
        %v549 = vadd.f32 0.0, %v548
        %550 = vmatmul.f32.gmra.mxu0 %v357
        %v551 = vpop.f32.mrf.mxu0
        %v552 = vadd.f32 0.0, %v551
        %553 = vmatmul.f32.gmra.mxu0 %v360
        %v554 = vpop.f32.mrf.mxu0
        %v555 = vadd.f32 0.0, %v554
        %556 = vmatmul.f32.gmra.mxu0 %v363
        %v557 = vpop.f32.mrf.mxu0
        %v558 = vadd.f32 0.0, %v557
        %559 = vmatmul.f32.gmra.mxu0 %v366
        %v560 = vpop.f32.mrf.mxu0
        %v561 = vadd.f32 0.0, %v560
        %562 = vmatmul.f32.gmra.mxu0 %v369
        %v563 = vpop.f32.mrf.mxu0
        %v564 = vadd.f32 0.0, %v563
        %565 = vmatmul.f32.gmra.mxu0 %v372
        %v566 = vpop.f32.mrf.mxu0
        %v567 = vadd.f32 0.0, %v566
        %568 = vmatmul.f32.gmra.mxu0 %v375
        %v569 = vpop.f32.mrf.mxu0
        %v570 = vadd.f32 0.0, %v569
        %571 = vmatmul.f32.gmra.mxu0 %v378
        %v572 = vpop.f32.mrf.mxu0
        %v573 = vadd.f32 0.0, %v572
        %574 = vmatmul.f32.gmra.mxu0 %v381
        %v575 = vpop.f32.mrf.mxu0
        %v576 = vadd.f32 0.0, %v575
        %577 = vmatmul.f32.gmra.mxu0 %v384
        %v578 = vpop.f32.mrf.mxu0
        %v579 = vadd.f32 0.0, %v578
        %580 = vmatmul.f32.gmra.mxu0 %v387
        %v581 = vpop.f32.mrf.mxu0
        %v582 = vadd.f32 0.0, %v581
        %583 = vmatmul.f32.gmra.mxu0 %v390
        %v584 = vpop.f32.mrf.mxu0
        %v585 = vadd.f32 0.0, %v584
        %586 = vmatmul.f32.gmra.mxu0 %v393
        %v587 = vpop.f32.mrf.mxu0
        %v588 = vadd.f32 0.0, %v587
        %589 = vmatmul.f32.gmra.mxu0 %v396
        %v590 = vpop.f32.mrf.mxu0
        %v591 = vadd.f32 0.0, %v590
        %592 = vdwg.mxu0
        %v593 = vld [vmem:[%s4] sm:$0xff]
        %v594 = vld [vmem:[%s4 + $0x8] sm:$0xff]
        %v595 = vld [vmem:[%s4 + $0x10] sm:$0xff]
        %v596 = vld [vmem:[%s4 + $0x18] sm:$0xff]
        %v597 = vld [vmem:[%s4 + $0x20] sm:$0xff]
        %v598 = vld [vmem:[%s4 + $0x28] sm:$0xff]
        %v599 = vld [vmem:[%s4 + $0x30] sm:$0xff]
        %v600 = vld [vmem:[%s4 + $0x38] sm:$0xff]
        %v601 = vld [vmem:[%s4 + $0x40] sm:$0xff]
        %v602 = vld [vmem:[%s4 + $0x48] sm:$0xff]
        %v603 = vld [vmem:[%s4 + $0x50] sm:$0xff]
        %v604 = vld [vmem:[%s4 + $0x58] sm:$0xff]
        %v605 = vld [vmem:[%s4 + $0x60] sm:$0xff]
        %v606 = vld [vmem:[%s4 + $0x68] sm:$0xff]
        %v607 = vld [vmem:[%s4 + $0x70] sm:$0xff]
        %v608 = vld [vmem:[%s4 + $0x78] sm:$0xff]
        %v609 = vld [vmem:[%s3] sm:$0xff]
        %v610 = vld [vmem:[%s3 + $0x8] sm:$0xff]
        %v611 = vld [vmem:[%s3 + $0x10] sm:$0xff]
        %v612 = vld [vmem:[%s3 + $0x18] sm:$0xff]
        %v613 = vld [vmem:[%s3 + $0x20] sm:$0xff]
        %v614 = vld [vmem:[%s3 + $0x28] sm:$0xff]
        %v615 = vld [vmem:[%s3 + $0x30] sm:$0xff]
        %v616 = vld [vmem:[%s3 + $0x38] sm:$0xff]
        %v617 = vld [vmem:[%s3 + $0x40] sm:$0xff]
        %v618 = vld [vmem:[%s3 + $0x48] sm:$0xff]
        %v619 = vld [vmem:[%s3 + $0x50] sm:$0xff]
        %v620 = vld [vmem:[%s3 + $0x58] sm:$0xff]
        %v621 = vld [vmem:[%s3 + $0x60] sm:$0xff]
        %v622 = vld [vmem:[%s3 + $0x68] sm:$0xff]
        %v623 = vld [vmem:[%s3 + $0x70] sm:$0xff]
        %v624 = vld [vmem:[%s3 + $0x78] sm:$0xff]
        %v625 = vmul.f32 %v609, %v481
        %v626 = vmul.f32 %v610, %v484
        %v627 = vmul.f32 %v611, %v487
        %v628 = vmul.f32 %v612, %v490
        %v629 = vmul.f32 %v613, %v493
        %v630 = vmul.f32 %v614, %v496
        %v631 = vmul.f32 %v615, %v499
        %v632 = vmul.f32 %v616, %v502
        %v633 = vmul.f32 %v617, %v505
        %v634 = vmul.f32 %v618, %v508
        %v635 = vmul.f32 %v619, %v511
        %v636 = vmul.f32 %v620, %v514
        %v637 = vmul.f32 %v621, %v517
        %v638 = vmul.f32 %v622, %v520
        %v639 = vmul.f32 %v623, %v523
        %v640 = vmul.f32 %v624, %v526
        %641 = vmatpush.msra.mxu0 %v640
        %642 = vmatpush.msra.mxu0 %v639
        %643 = vmatpush.msra.mxu0 %v638
        %644 = vmatpush.msra.mxu0 %v637
        %645 = vmatpush.msra.mxu0 %v636
        %646 = vmatpush.msra.mxu0 %v635
        %647 = vmatpush.msra.mxu0 %v634
        %648 = vmatpush.msra.mxu0 %v633
        %649 = vmatpush.msra.mxu0 %v632
        %650 = vmatpush.msra.mxu0 %v631
        %651 = vmatpush.msra.mxu0 %v630
        %652 = vmatpush.msra.mxu0 %v629
        %653 = vmatpush.msra.mxu0 %v628
        %654 = vmatpush.msra.mxu0 %v627
        %655 = vmatpush.msra.mxu0 %v626
        %656 = vmatpush.msra.mxu0 %v625
        %657 = vmatmul.f32.gmra.mxu0 %v593
        %v658 = vpop.f32.mrf.mxu0
        %v659 = vadd.f32 0.0, %v658
        %660 = vmatmul.f32.gmra.mxu0 %v594
        %v661 = vpop.f32.mrf.mxu0
        %v662 = vadd.f32 0.0, %v661
        %663 = vmatmul.f32.gmra.mxu0 %v595
        %v664 = vpop.f32.mrf.mxu0
        %v665 = vadd.f32 0.0, %v664
        %666 = vmatmul.f32.gmra.mxu0 %v596
        %v667 = vpop.f32.mrf.mxu0
        %v668 = vadd.f32 0.0, %v667
        %669 = vmatmul.f32.gmra.mxu0 %v597
        %v670 = vpop.f32.mrf.mxu0
        %v671 = vadd.f32 0.0, %v670
        %672 = vmatmul.f32.gmra.mxu0 %v598
        %v673 = vpop.f32.mrf.mxu0
        %v674 = vadd.f32 0.0, %v673
        %675 = vmatmul.f32.gmra.mxu0 %v599
        %v676 = vpop.f32.mrf.mxu0
        %v677 = vadd.f32 0.0, %v676
        %678 = vmatmul.f32.gmra.mxu0 %v600
        %v679 = vpop.f32.mrf.mxu0
        %v680 = vadd.f32 0.0, %v679
        %681 = vmatmul.f32.gmra.mxu0 %v601
        %v682 = vpop.f32.mrf.mxu0
        %v683 = vadd.f32 0.0, %v682
        %684 = vmatmul.f32.gmra.mxu0 %v602
        %v685 = vpop.f32.mrf.mxu0
        %v686 = vadd.f32 0.0, %v685
        %687 = vmatmul.f32.gmra.mxu0 %v603
        %v688 = vpop.f32.mrf.mxu0
        %v689 = vadd.f32 0.0, %v688
        %690 = vmatmul.f32.gmra.mxu0 %v604
        %v691 = vpop.f32.mrf.mxu0
        %v692 = vadd.f32 0.0, %v691
        %693 = vmatmul.f32.gmra.mxu0 %v605
        %v694 = vpop.f32.mrf.mxu0
        %v695 = vadd.f32 0.0, %v694
        %696 = vmatmul.f32.gmra.mxu0 %v606
        %v697 = vpop.f32.mrf.mxu0
        %v698 = vadd.f32 0.0, %v697
        %699 = vmatmul.f32.gmra.mxu0 %v607
        %v700 = vpop.f32.mrf.mxu0
        %v701 = vadd.f32 0.0, %v700
        %702 = vmatmul.f32.gmra.mxu0 %v608
        %v703 = vpop.f32.mrf.mxu0
        %v704 = vadd.f32 0.0, %v703
        %705 = vdwg.mxu0
        %v706 = vadd.f32 %v416, %v659
        %v707 = vadd.f32 %v419, %v662
        %v708 = vadd.f32 %v422, %v665
        %v709 = vadd.f32 %v425, %v668
        %v710 = vadd.f32 %v428, %v671
        %v711 = vadd.f32 %v431, %v674
        %v712 = vadd.f32 %v434, %v677
        %v713 = vadd.f32 %v437, %v680
        %v714 = vadd.f32 %v440, %v683
        %v715 = vadd.f32 %v443, %v686
        %v716 = vadd.f32 %v446, %v689
        %v717 = vadd.f32 %v449, %v692
        %v718 = vadd.f32 %v452, %v695
        %v719 = vadd.f32 %v455, %v698
        %v720 = vadd.f32 %v458, %v701
        %v721 = vadd.f32 %v461, %v704
        %vm722 = vcmp.ge.f32.partialorder %v706, 0.0
        %vm723 = vcmp.ge.f32.partialorder %v707, 0.0
        %vm724 = vcmp.ge.f32.partialorder %v708, 0.0
        %vm725 = vcmp.ge.f32.partialorder %v709, 0.0
        %vm726 = vcmp.ge.f32.partialorder %v710, 0.0
        %vm727 = vcmp.ge.f32.partialorder %v711, 0.0
        %vm728 = vcmp.ge.f32.partialorder %v712, 0.0
        %vm729 = vcmp.ge.f32.partialorder %v713, 0.0
        %vm730 = vcmp.ge.f32.partialorder %v714, 0.0
        %vm731 = vcmp.ge.f32.partialorder %v715, 0.0
        %vm732 = vcmp.ge.f32.partialorder %v716, 0.0
        %vm733 = vcmp.ge.f32.partialorder %v717, 0.0
        %vm734 = vcmp.ge.f32.partialorder %v718, 0.0
        %vm735 = vcmp.ge.f32.partialorder %v719, 0.0
        %vm736 = vcmp.ge.f32.partialorder %v720, 0.0
        %vm737 = vcmp.ge.f32.partialorder %v721, 0.0
        %v738 = vmul.f32 %v706, 0.2
        %v739 = vmul.f32 %v707, 0.2
        %v740 = vmul.f32 %v708, 0.2
        %v741 = vmul.f32 %v709, 0.2
        %v742 = vmul.f32 %v710, 0.2
        %v743 = vmul.f32 %v711, 0.2
        %v744 = vmul.f32 %v712, 0.2
        %v745 = vmul.f32 %v713, 0.2
        %v746 = vmul.f32 %v714, 0.2
        %v747 = vmul.f32 %v715, 0.2
        %v748 = vmul.f32 %v716, 0.2
        %v749 = vmul.f32 %v717, 0.2
        %v750 = vmul.f32 %v718, 0.2
        %v751 = vmul.f32 %v719, 0.2
        %v752 = vmul.f32 %v720, 0.2
        %v753 = vmul.f32 %v721, 0.2
        %v754 = vsel %vm722, %v706, %v738
        %v755 = vsel %vm723, %v707, %v739
        %v756 = vsel %vm724, %v708, %v740
        %v757 = vsel %vm725, %v709, %v741
        %v758 = vsel %vm726, %v710, %v742
        %v759 = vsel %vm727, %v711, %v743
        %v760 = vsel %vm728, %v712, %v744
        %v761 = vsel %vm729, %v713, %v745
        %v762 = vsel %vm730, %v714, %v746
        %v763 = vsel %vm731, %v715, %v747
        %v764 = vsel %vm732, %v716, %v748
        %v765 = vsel %vm733, %v717, %v749
        %v766 = vsel %vm734, %v718, %v750
        %v767 = vsel %vm735, %v719, %v751
        %v768 = vsel %vm736, %v720, %v752
        %v769 = vsel %vm737, %v721, %v753
        %v770 = vld [vmem:[%s313] sm:$0xff]
        %v771 = vld [vmem:[%s313 + $0x8] sm:$0xff]
        %v772 = vld [vmem:[%s313 + $0x10] sm:$0xff]
        %v773 = vld [vmem:[%s313 + $0x18] sm:$0xff]
        %v774 = vld [vmem:[%s313 + $0x20] sm:$0xff]
        %v775 = vld [vmem:[%s313 + $0x28] sm:$0xff]
        %v776 = vld [vmem:[%s313 + $0x30] sm:$0xff]
        %v777 = vld [vmem:[%s313 + $0x38] sm:$0xff]
        %v778 = vld [vmem:[%s313 + $0x40] sm:$0xff]
        %v779 = vld [vmem:[%s313 + $0x48] sm:$0xff]
        %v780 = vld [vmem:[%s313 + $0x50] sm:$0xff]
        %v781 = vld [vmem:[%s313 + $0x58] sm:$0xff]
        %v782 = vld [vmem:[%s313 + $0x60] sm:$0xff]
        %v783 = vld [vmem:[%s313 + $0x68] sm:$0xff]
        %v784 = vld [vmem:[%s313 + $0x70] sm:$0xff]
        %v785 = vld [vmem:[%s313 + $0x78] sm:$0xff]
        %v786 = vadd.f32 %v754, %v770
        %v787 = vadd.f32 %v755, %v771
        %v788 = vadd.f32 %v756, %v772
        %v789 = vadd.f32 %v757, %v773
        %v790 = vadd.f32 %v758, %v774
        %v791 = vadd.f32 %v759, %v775
        %v792 = vadd.f32 %v760, %v776
        %v793 = vadd.f32 %v761, %v777
        %v794 = vadd.f32 %v762, %v778
        %v795 = vadd.f32 %v763, %v779
        %v796 = vadd.f32 %v764, %v780
        %v797 = vadd.f32 %v765, %v781
        %v798 = vadd.f32 %v766, %v782
        %v799 = vadd.f32 %v767, %v783
        %v800 = vadd.f32 %v768, %v784
        %v801 = vadd.f32 %v769, %v785
        %802 = vrot.lane.b32.xlu0 %v786, 8
        %v803 = vpop.permute.xlu0 %802
        %804 = vrot.lane.b32.xlu0 %v787, 8
        %v805 = vpop.permute.xlu0 %804
        %806 = vrot.lane.b32.xlu0 %v788, 8
        %v807 = vpop.permute.xlu0 %806
        %808 = vrot.lane.b32.xlu0 %v789, 8
        %v809 = vpop.permute.xlu0 %808
        %810 = vrot.lane.b32.xlu0 %v790, 8
        %v811 = vpop.permute.xlu0 %810
        %812 = vrot.lane.b32.xlu0 %v791, 8
        %v813 = vpop.permute.xlu0 %812
        %814 = vrot.lane.b32.xlu0 %v792, 8
        %v815 = vpop.permute.xlu0 %814
        %816 = vrot.lane.b32.xlu0 %v793, 8
        %v817 = vpop.permute.xlu0 %816
        %818 = vrot.lane.b32.xlu0 %v794, 8
        %v819 = vpop.permute.xlu0 %818
        %820 = vrot.lane.b32.xlu0 %v795, 8
        %v821 = vpop.permute.xlu0 %820
        %822 = vrot.lane.b32.xlu0 %v796, 8
        %v823 = vpop.permute.xlu0 %822
        %824 = vrot.lane.b32.xlu0 %v797, 8
        %v825 = vpop.permute.xlu0 %824
        %826 = vrot.lane.b32.xlu0 %v798, 8
        %v827 = vpop.permute.xlu0 %826
        %828 = vrot.lane.b32.xlu0 %v799, 8
        %v829 = vpop.permute.xlu0 %828
        %830 = vrot.lane.b32.xlu0 %v800, 8
        %v831 = vpop.permute.xlu0 %830
        %832 = vrot.lane.b32.xlu0 %v801, 8
        %v833 = vpop.permute.xlu0 %832
        %v834 = vmax.f32 %v786, %v803
        %v835 = vmax.f32 %v787, %v805
        %v836 = vmax.f32 %v788, %v807
        %v837 = vmax.f32 %v789, %v809
        %v838 = vmax.f32 %v790, %v811
        %v839 = vmax.f32 %v791, %v813
        %v840 = vmax.f32 %v792, %v815
        %v841 = vmax.f32 %v793, %v817
        %v842 = vmax.f32 %v794, %v819
        %v843 = vmax.f32 %v795, %v821
        %v844 = vmax.f32 %v796, %v823
        %v845 = vmax.f32 %v797, %v825
        %v846 = vmax.f32 %v798, %v827
        %v847 = vmax.f32 %v799, %v829
        %v848 = vmax.f32 %v800, %v831
        %v849 = vmax.f32 %v801, %v833
        %850 = vrot.lane.b32.xlu0 %v834, 16
        %v851 = vpop.permute.xlu0 %850
        %852 = vrot.lane.b32.xlu0 %v835, 16
        %v853 = vpop.permute.xlu0 %852
        %854 = vrot.lane.b32.xlu0 %v836, 16
        %v855 = vpop.permute.xlu0 %854
        %856 = vrot.lane.b32.xlu0 %v837, 16
        %v857 = vpop.permute.xlu0 %856
        %858 = vrot.lane.b32.xlu0 %v838, 16
        %v859 = vpop.permute.xlu0 %858
        %860 = vrot.lane.b32.xlu0 %v839, 16
        %v861 = vpop.permute.xlu0 %860
        %862 = vrot.lane.b32.xlu0 %v840, 16
        %v863 = vpop.permute.xlu0 %862
        %864 = vrot.lane.b32.xlu0 %v841, 16
        %v865 = vpop.permute.xlu0 %864
        %866 = vrot.lane.b32.xlu0 %v842, 16
        %v867 = vpop.permute.xlu0 %866
        %868 = vrot.lane.b32.xlu0 %v843, 16
        %v869 = vpop.permute.xlu0 %868
        %870 = vrot.lane.b32.xlu0 %v844, 16
        %v871 = vpop.permute.xlu0 %870
        %872 = vrot.lane.b32.xlu0 %v845, 16
        %v873 = vpop.permute.xlu0 %872
        %874 = vrot.lane.b32.xlu0 %v846, 16
        %v875 = vpop.permute.xlu0 %874
        %876 = vrot.lane.b32.xlu0 %v847, 16
        %v877 = vpop.permute.xlu0 %876
        %878 = vrot.lane.b32.xlu0 %v848, 16
        %v879 = vpop.permute.xlu0 %878
        %880 = vrot.lane.b32.xlu0 %v849, 16
        %v881 = vpop.permute.xlu0 %880
        %v882 = vmax.f32 %v834, %v851
        %v883 = vmax.f32 %v835, %v853
        %v884 = vmax.f32 %v836, %v855
        %v885 = vmax.f32 %v837, %v857
        %v886 = vmax.f32 %v838, %v859
        %v887 = vmax.f32 %v839, %v861
        %v888 = vmax.f32 %v840, %v863
        %v889 = vmax.f32 %v841, %v865
        %v890 = vmax.f32 %v842, %v867
        %v891 = vmax.f32 %v843, %v869
        %v892 = vmax.f32 %v844, %v871
        %v893 = vmax.f32 %v845, %v873
        %v894 = vmax.f32 %v846, %v875
        %v895 = vmax.f32 %v847, %v877
        %v896 = vmax.f32 %v848, %v879
        %v897 = vmax.f32 %v849, %v881
        %898 = vrot.lane.b32.xlu0 %v882, 32
        %v899 = vpop.permute.xlu0 %898
        %900 = vrot.lane.b32.xlu0 %v883, 32
        %v901 = vpop.permute.xlu0 %900
        %902 = vrot.lane.b32.xlu0 %v884, 32
        %v903 = vpop.permute.xlu0 %902
        %904 = vrot.lane.b32.xlu0 %v885, 32
        %v905 = vpop.permute.xlu0 %904
        %906 = vrot.lane.b32.xlu0 %v886, 32
        %v907 = vpop.permute.xlu0 %906
        %908 = vrot.lane.b32.xlu0 %v887, 32
        %v909 = vpop.permute.xlu0 %908
        %910 = vrot.lane.b32.xlu0 %v888, 32
        %v911 = vpop.permute.xlu0 %910
        %912 = vrot.lane.b32.xlu0 %v889, 32
        %v913 = vpop.permute.xlu0 %912
        %914 = vrot.lane.b32.xlu0 %v890, 32
        %v915 = vpop.permute.xlu0 %914
        %916 = vrot.lane.b32.xlu0 %v891, 32
        %v917 = vpop.permute.xlu0 %916
        %918 = vrot.lane.b32.xlu0 %v892, 32
        %v919 = vpop.permute.xlu0 %918
        %920 = vrot.lane.b32.xlu0 %v893, 32
        %v921 = vpop.permute.xlu0 %920
        %922 = vrot.lane.b32.xlu0 %v894, 32
        %v923 = vpop.permute.xlu0 %922
        %924 = vrot.lane.b32.xlu0 %v895, 32
        %v925 = vpop.permute.xlu0 %924
        %926 = vrot.lane.b32.xlu0 %v896, 32
        %v927 = vpop.permute.xlu0 %926
        %928 = vrot.lane.b32.xlu0 %v897, 32
        %v929 = vpop.permute.xlu0 %928
        %v930 = vmax.f32 %v882, %v899
        %v931 = vmax.f32 %v883, %v901
        %v932 = vmax.f32 %v884, %v903
        %v933 = vmax.f32 %v885, %v905
        %v934 = vmax.f32 %v886, %v907
        %v935 = vmax.f32 %v887, %v909
        %v936 = vmax.f32 %v888, %v911
        %v937 = vmax.f32 %v889, %v913
        %v938 = vmax.f32 %v890, %v915
        %v939 = vmax.f32 %v891, %v917
        %v940 = vmax.f32 %v892, %v919
        %v941 = vmax.f32 %v893, %v921
        %v942 = vmax.f32 %v894, %v923
        %v943 = vmax.f32 %v895, %v925
        %v944 = vmax.f32 %v896, %v927
        %v945 = vmax.f32 %v897, %v929
        %946 = vrot.lane.b32.xlu0 %v930, 64
        %v947 = vpop.permute.xlu0 %946
        %948 = vrot.lane.b32.xlu0 %v931, 64
        %v949 = vpop.permute.xlu0 %948
        %950 = vrot.lane.b32.xlu0 %v932, 64
        %v951 = vpop.permute.xlu0 %950
        %952 = vrot.lane.b32.xlu0 %v933, 64
        %v953 = vpop.permute.xlu0 %952
        %954 = vrot.lane.b32.xlu0 %v934, 64
        %v955 = vpop.permute.xlu0 %954
        %956 = vrot.lane.b32.xlu0 %v935, 64
        %v957 = vpop.permute.xlu0 %956
        %958 = vrot.lane.b32.xlu0 %v936, 64
        %v959 = vpop.permute.xlu0 %958
        %960 = vrot.lane.b32.xlu0 %v937, 64
        %v961 = vpop.permute.xlu0 %960
        %962 = vrot.lane.b32.xlu0 %v938, 64
        %v963 = vpop.permute.xlu0 %962
        %964 = vrot.lane.b32.xlu0 %v939, 64
        %v965 = vpop.permute.xlu0 %964
        %966 = vrot.lane.b32.xlu0 %v940, 64
        %v967 = vpop.permute.xlu0 %966
        %968 = vrot.lane.b32.xlu0 %v941, 64
        %v969 = vpop.permute.xlu0 %968
        %970 = vrot.lane.b32.xlu0 %v942, 64
        %v971 = vpop.permute.xlu0 %970
        %972 = vrot.lane.b32.xlu0 %v943, 64
        %v973 = vpop.permute.xlu0 %972
        %974 = vrot.lane.b32.xlu0 %v944, 64
        %v975 = vpop.permute.xlu0 %974
        %976 = vrot.lane.b32.xlu0 %v945, 64
        %v977 = vpop.permute.xlu0 %976
        %v978 = vmax.f32 %v930, %v947
        %v979 = vmax.f32 %v931, %v949
        %v980 = vmax.f32 %v932, %v951
        %v981 = vmax.f32 %v933, %v953
        %v982 = vmax.f32 %v934, %v955
        %v983 = vmax.f32 %v935, %v957
        %v984 = vmax.f32 %v936, %v959
        %v985 = vmax.f32 %v937, %v961
        %v986 = vmax.f32 %v938, %v963
        %v987 = vmax.f32 %v939, %v965
        %v988 = vmax.f32 %v940, %v967
        %v989 = vmax.f32 %v941, %v969
        %v990 = vmax.f32 %v942, %v971
        %v991 = vmax.f32 %v943, %v973
        %v992 = vmax.f32 %v944, %v975
        %v993 = vmax.f32 %v945, %v977
        %vm994 = vcmp.eq.f32.partialorder %v978, -inf
        %vm995 = vcmp.eq.f32.partialorder %v979, -inf
        %vm996 = vcmp.eq.f32.partialorder %v980, -inf
        %vm997 = vcmp.eq.f32.partialorder %v981, -inf
        %vm998 = vcmp.eq.f32.partialorder %v982, -inf
        %vm999 = vcmp.eq.f32.partialorder %v983, -inf
        %vm1000 = vcmp.eq.f32.partialorder %v984, -inf
        %vm1001 = vcmp.eq.f32.partialorder %v985, -inf
        %vm1002 = vcmp.eq.f32.partialorder %v986, -inf
        %vm1003 = vcmp.eq.f32.partialorder %v987, -inf
        %vm1004 = vcmp.eq.f32.partialorder %v988, -inf
        %vm1005 = vcmp.eq.f32.partialorder %v989, -inf
        %vm1006 = vcmp.eq.f32.partialorder %v990, -inf
        %vm1007 = vcmp.eq.f32.partialorder %v991, -inf
        %vm1008 = vcmp.eq.f32.partialorder %v992, -inf
        %vm1009 = vcmp.eq.f32.partialorder %v993, -inf
        %v1010 = vsel %vm994, 0.0, %v978
        %v1011 = vsel %vm995, 0.0, %v979
        %v1012 = vsel %vm996, 0.0, %v980
        %v1013 = vsel %vm997, 0.0, %v981
        %v1014 = vsel %vm998, 0.0, %v982
        %v1015 = vsel %vm999, 0.0, %v983
        %v1016 = vsel %vm1000, 0.0, %v984
        %v1017 = vsel %vm1001, 0.0, %v985
        %v1018 = vsel %vm1002, 0.0, %v986
        %v1019 = vsel %vm1003, 0.0, %v987
        %v1020 = vsel %vm1004, 0.0, %v988
        %v1021 = vsel %vm1005, 0.0, %v989
        %v1022 = vsel %vm1006, 0.0, %v990
        %v1023 = vsel %vm1007, 0.0, %v991
        %v1024 = vsel %vm1008, 0.0, %v992
        %v1025 = vsel %vm1009, 0.0, %v993
        %v1026 = vsub.f32 %v786, %v1010
        %v1027 = vsub.f32 %v787, %v1011
        %v1028 = vsub.f32 %v788, %v1012
        %v1029 = vsub.f32 %v789, %v1013
        %v1030 = vsub.f32 %v790, %v1014
        %v1031 = vsub.f32 %v791, %v1015
        %v1032 = vsub.f32 %v792, %v1016
        %v1033 = vsub.f32 %v793, %v1017
        %v1034 = vsub.f32 %v794, %v1018
        %v1035 = vsub.f32 %v795, %v1019
        %v1036 = vsub.f32 %v796, %v1020
        %v1037 = vsub.f32 %v797, %v1021
        %v1038 = vsub.f32 %v798, %v1022
        %v1039 = vsub.f32 %v799, %v1023
        %v1040 = vsub.f32 %v800, %v1024
        %v1041 = vsub.f32 %v801, %v1025
        %v1042 = vmul.f32 %v1026, 1.442695
        %v1043 = vpow.pop %v1042
        %v1044 = vmul.f32 %v1027, 1.442695
        %v1045 = vpow.pop %v1044
        %v1046 = vmul.f32 %v1028, 1.442695
        %v1047 = vpow.pop %v1046
        %v1048 = vmul.f32 %v1029, 1.442695
        %v1049 = vpow.pop %v1048
        %v1050 = vmul.f32 %v1030, 1.442695
        %v1051 = vpow.pop %v1050
        %v1052 = vmul.f32 %v1031, 1.442695
        %v1053 = vpow.pop %v1052
        %v1054 = vmul.f32 %v1032, 1.442695
        %v1055 = vpow.pop %v1054
        %v1056 = vmul.f32 %v1033, 1.442695
        %v1057 = vpow.pop %v1056
        %v1058 = vmul.f32 %v1034, 1.442695
        %v1059 = vpow.pop %v1058
        %v1060 = vmul.f32 %v1035, 1.442695
        %v1061 = vpow.pop %v1060
        %v1062 = vmul.f32 %v1036, 1.442695
        %v1063 = vpow.pop %v1062
        %v1064 = vmul.f32 %v1037, 1.442695
        %v1065 = vpow.pop %v1064
        %v1066 = vmul.f32 %v1038, 1.442695
        %v1067 = vpow.pop %v1066
        %v1068 = vmul.f32 %v1039, 1.442695
        %v1069 = vpow.pop %v1068
        %v1070 = vmul.f32 %v1040, 1.442695
        %v1071 = vpow.pop %v1070
        %v1072 = vmul.f32 %v1041, 1.442695
        %v1073 = vpow.pop %v1072
        %1074 = vrot.lane.b32.xlu0 %v1043, 8
        %v1075 = vpop.permute.xlu0 %1074
        %1076 = vrot.lane.b32.xlu0 %v1045, 8
        %v1077 = vpop.permute.xlu0 %1076
        %1078 = vrot.lane.b32.xlu0 %v1047, 8
        %v1079 = vpop.permute.xlu0 %1078
        %1080 = vrot.lane.b32.xlu0 %v1049, 8
        %v1081 = vpop.permute.xlu0 %1080
        %1082 = vrot.lane.b32.xlu0 %v1051, 8
        %v1083 = vpop.permute.xlu0 %1082
        %1084 = vrot.lane.b32.xlu0 %v1053, 8
        %v1085 = vpop.permute.xlu0 %1084
        %1086 = vrot.lane.b32.xlu0 %v1055, 8
        %v1087 = vpop.permute.xlu0 %1086
        %1088 = vrot.lane.b32.xlu0 %v1057, 8
        %v1089 = vpop.permute.xlu0 %1088
        %1090 = vrot.lane.b32.xlu0 %v1059, 8
        %v1091 = vpop.permute.xlu0 %1090
        %1092 = vrot.lane.b32.xlu0 %v1061, 8
        %v1093 = vpop.permute.xlu0 %1092
        %1094 = vrot.lane.b32.xlu0 %v1063, 8
        %v1095 = vpop.permute.xlu0 %1094
        %1096 = vrot.lane.b32.xlu0 %v1065, 8
        %v1097 = vpop.permute.xlu0 %1096
        %1098 = vrot.lane.b32.xlu0 %v1067, 8
        %v1099 = vpop.permute.xlu0 %1098
        %1100 = vrot.lane.b32.xlu0 %v1069, 8
        %v1101 = vpop.permute.xlu0 %1100
        %1102 = vrot.lane.b32.xlu0 %v1071, 8
        %v1103 = vpop.permute.xlu0 %1102
        %1104 = vrot.lane.b32.xlu0 %v1073, 8
        %v1105 = vpop.permute.xlu0 %1104
        %v1106 = vadd.f32 %v1043, %v1075
        %v1107 = vadd.f32 %v1045, %v1077
        %v1108 = vadd.f32 %v1047, %v1079
        %v1109 = vadd.f32 %v1049, %v1081
        %v1110 = vadd.f32 %v1051, %v1083
        %v1111 = vadd.f32 %v1053, %v1085
        %v1112 = vadd.f32 %v1055, %v1087
        %v1113 = vadd.f32 %v1057, %v1089
        %v1114 = vadd.f32 %v1059, %v1091
        %v1115 = vadd.f32 %v1061, %v1093
        %v1116 = vadd.f32 %v1063, %v1095
        %v1117 = vadd.f32 %v1065, %v1097
        %v1118 = vadd.f32 %v1067, %v1099
        %v1119 = vadd.f32 %v1069, %v1101
        %v1120 = vadd.f32 %v1071, %v1103
        %v1121 = vadd.f32 %v1073, %v1105
        %1122 = vrot.lane.b32.xlu0 %v1106, 16
        %v1123 = vpop.permute.xlu0 %1122
        %1124 = vrot.lane.b32.xlu0 %v1107, 16
        %v1125 = vpop.permute.xlu0 %1124
        %1126 = vrot.lane.b32.xlu0 %v1108, 16
        %v1127 = vpop.permute.xlu0 %1126
        %1128 = vrot.lane.b32.xlu0 %v1109, 16
        %v1129 = vpop.permute.xlu0 %1128
        %1130 = vrot.lane.b32.xlu0 %v1110, 16
        %v1131 = vpop.permute.xlu0 %1130
        %1132 = vrot.lane.b32.xlu0 %v1111, 16
        %v1133 = vpop.permute.xlu0 %1132
        %1134 = vrot.lane.b32.xlu0 %v1112, 16
        %v1135 = vpop.permute.xlu0 %1134
        %1136 = vrot.lane.b32.xlu0 %v1113, 16
        %v1137 = vpop.permute.xlu0 %1136
        %1138 = vrot.lane.b32.xlu0 %v1114, 16
        %v1139 = vpop.permute.xlu0 %1138
        %1140 = vrot.lane.b32.xlu0 %v1115, 16
        %v1141 = vpop.permute.xlu0 %1140
        %1142 = vrot.lane.b32.xlu0 %v1116, 16
        %v1143 = vpop.permute.xlu0 %1142
        %1144 = vrot.lane.b32.xlu0 %v1117, 16
        %v1145 = vpop.permute.xlu0 %1144
        %1146 = vrot.lane.b32.xlu0 %v1118, 16
        %v1147 = vpop.permute.xlu0 %1146
        %1148 = vrot.lane.b32.xlu0 %v1119, 16
        %v1149 = vpop.permute.xlu0 %1148
        %1150 = vrot.lane.b32.xlu0 %v1120, 16
        %v1151 = vpop.permute.xlu0 %1150
        %1152 = vrot.lane.b32.xlu0 %v1121, 16
        %v1153 = vpop.permute.xlu0 %1152
        %v1154 = vadd.f32 %v1106, %v1123
        %v1155 = vadd.f32 %v1107, %v1125
        %v1156 = vadd.f32 %v1108, %v1127
        %v1157 = vadd.f32 %v1109, %v1129
        %v1158 = vadd.f32 %v1110, %v1131
        %v1159 = vadd.f32 %v1111, %v1133
        %v1160 = vadd.f32 %v1112, %v1135
        %v1161 = vadd.f32 %v1113, %v1137
        %v1162 = vadd.f32 %v1114, %v1139
        %v1163 = vadd.f32 %v1115, %v1141
        %v1164 = vadd.f32 %v1116, %v1143
        %v1165 = vadd.f32 %v1117, %v1145
        %v1166 = vadd.f32 %v1118, %v1147
        %v1167 = vadd.f32 %v1119, %v1149
        %v1168 = vadd.f32 %v1120, %v1151
        %v1169 = vadd.f32 %v1121, %v1153
        %1170 = vrot.lane.b32.xlu0 %v1154, 32
        %v1171 = vpop.permute.xlu0 %1170
        %1172 = vrot.lane.b32.xlu0 %v1155, 32
        %v1173 = vpop.permute.xlu0 %1172
        %1174 = vrot.lane.b32.xlu0 %v1156, 32
        %v1175 = vpop.permute.xlu0 %1174
        %1176 = vrot.lane.b32.xlu0 %v1157, 32
        %v1177 = vpop.permute.xlu0 %1176
        %1178 = vrot.lane.b32.xlu0 %v1158, 32
        %v1179 = vpop.permute.xlu0 %1178
        %1180 = vrot.lane.b32.xlu0 %v1159, 32
        %v1181 = vpop.permute.xlu0 %1180
        %1182 = vrot.lane.b32.xlu0 %v1160, 32
        %v1183 = vpop.permute.xlu0 %1182
        %1184 = vrot.lane.b32.xlu0 %v1161, 32
        %v1185 = vpop.permute.xlu0 %1184
        %1186 = vrot.lane.b32.xlu0 %v1162, 32
        %v1187 = vpop.permute.xlu0 %1186
        %1188 = vrot.lane.b32.xlu0 %v1163, 32
        %v1189 = vpop.permute.xlu0 %1188
        %1190 = vrot.lane.b32.xlu0 %v1164, 32
        %v1191 = vpop.permute.xlu0 %1190
        %1192 = vrot.lane.b32.xlu0 %v1165, 32
        %v1193 = vpop.permute.xlu0 %1192
        %1194 = vrot.lane.b32.xlu0 %v1166, 32
        %v1195 = vpop.permute.xlu0 %1194
        %1196 = vrot.lane.b32.xlu0 %v1167, 32
        %v1197 = vpop.permute.xlu0 %1196
        %1198 = vrot.lane.b32.xlu0 %v1168, 32
        %v1199 = vpop.permute.xlu0 %1198
        %1200 = vrot.lane.b32.xlu0 %v1169, 32
        %v1201 = vpop.permute.xlu0 %1200
        %v1202 = vadd.f32 %v1154, %v1171
        %v1203 = vadd.f32 %v1155, %v1173
        %v1204 = vadd.f32 %v1156, %v1175
        %v1205 = vadd.f32 %v1157, %v1177
        %v1206 = vadd.f32 %v1158, %v1179
        %v1207 = vadd.f32 %v1159, %v1181
        %v1208 = vadd.f32 %v1160, %v1183
        %v1209 = vadd.f32 %v1161, %v1185
        %v1210 = vadd.f32 %v1162, %v1187
        %v1211 = vadd.f32 %v1163, %v1189
        %v1212 = vadd.f32 %v1164, %v1191
        %v1213 = vadd.f32 %v1165, %v1193
        %v1214 = vadd.f32 %v1166, %v1195
        %v1215 = vadd.f32 %v1167, %v1197
        %v1216 = vadd.f32 %v1168, %v1199
        %v1217 = vadd.f32 %v1169, %v1201
        %1218 = vrot.lane.b32.xlu0 %v1202, 64
        %v1219 = vpop.permute.xlu0 %1218
        %1220 = vrot.lane.b32.xlu0 %v1203, 64
        %v1221 = vpop.permute.xlu0 %1220
        %1222 = vrot.lane.b32.xlu0 %v1204, 64
        %v1223 = vpop.permute.xlu0 %1222
        %1224 = vrot.lane.b32.xlu0 %v1205, 64
        %v1225 = vpop.permute.xlu0 %1224
        %1226 = vrot.lane.b32.xlu0 %v1206, 64
        %v1227 = vpop.permute.xlu0 %1226
        %1228 = vrot.lane.b32.xlu0 %v1207, 64
        %v1229 = vpop.permute.xlu0 %1228
        %1230 = vrot.lane.b32.xlu0 %v1208, 64
        %v1231 = vpop.permute.xlu0 %1230
        %1232 = vrot.lane.b32.xlu0 %v1209, 64
        %v1233 = vpop.permute.xlu0 %1232
        %1234 = vrot.lane.b32.xlu0 %v1210, 64
        %v1235 = vpop.permute.xlu0 %1234
        %1236 = vrot.lane.b32.xlu0 %v1211, 64
        %v1237 = vpop.permute.xlu0 %1236
        %1238 = vrot.lane.b32.xlu0 %v1212, 64
        %v1239 = vpop.permute.xlu0 %1238
        %1240 = vrot.lane.b32.xlu0 %v1213, 64
        %v1241 = vpop.permute.xlu0 %1240
        %1242 = vrot.lane.b32.xlu0 %v1214, 64
        %v1243 = vpop.permute.xlu0 %1242
        %1244 = vrot.lane.b32.xlu0 %v1215, 64
        %v1245 = vpop.permute.xlu0 %1244
        %1246 = vrot.lane.b32.xlu0 %v1216, 64
        %v1247 = vpop.permute.xlu0 %1246
        %1248 = vrot.lane.b32.xlu0 %v1217, 64
        %v1249 = vpop.permute.xlu0 %1248
        %v1250 = vadd.f32 %v1202, %v1219
        %v1251 = vadd.f32 %v1203, %v1221
        %v1252 = vadd.f32 %v1204, %v1223
        %v1253 = vadd.f32 %v1205, %v1225
        %v1254 = vadd.f32 %v1206, %v1227
        %v1255 = vadd.f32 %v1207, %v1229
        %v1256 = vadd.f32 %v1208, %v1231
        %v1257 = vadd.f32 %v1209, %v1233
        %v1258 = vadd.f32 %v1210, %v1235
        %v1259 = vadd.f32 %v1211, %v1237
        %v1260 = vadd.f32 %v1212, %v1239
        %v1261 = vadd.f32 %v1213, %v1241
        %v1262 = vadd.f32 %v1214, %v1243
        %v1263 = vadd.f32 %v1215, %v1245
        %v1264 = vadd.f32 %v1216, %v1247
        %v1265 = vadd.f32 %v1217, %v1249
        %vm1266 = vcmp.gt.f32.partialorder %v1250, 0.0
        %vm1267 = vcmp.gt.f32.partialorder %v1251, 0.0
        %vm1268 = vcmp.gt.f32.partialorder %v1252, 0.0
        %vm1269 = vcmp.gt.f32.partialorder %v1253, 0.0
        %vm1270 = vcmp.gt.f32.partialorder %v1254, 0.0
        %vm1271 = vcmp.gt.f32.partialorder %v1255, 0.0
        %vm1272 = vcmp.gt.f32.partialorder %v1256, 0.0
        %vm1273 = vcmp.gt.f32.partialorder %v1257, 0.0
        %vm1274 = vcmp.gt.f32.partialorder %v1258, 0.0
        %vm1275 = vcmp.gt.f32.partialorder %v1259, 0.0
        %vm1276 = vcmp.gt.f32.partialorder %v1260, 0.0
        %vm1277 = vcmp.gt.f32.partialorder %v1261, 0.0
        %vm1278 = vcmp.gt.f32.partialorder %v1262, 0.0
        %vm1279 = vcmp.gt.f32.partialorder %v1263, 0.0
        %vm1280 = vcmp.gt.f32.partialorder %v1264, 0.0
        %vm1281 = vcmp.gt.f32.partialorder %v1265, 0.0
        %v1282 = vsel %vm1266, %v1250, 1.0
        %v1283 = vsel %vm1267, %v1251, 1.0
        %v1284 = vsel %vm1268, %v1252, 1.0
        %v1285 = vsel %vm1269, %v1253, 1.0
        %v1286 = vsel %vm1270, %v1254, 1.0
        %v1287 = vsel %vm1271, %v1255, 1.0
        %v1288 = vsel %vm1272, %v1256, 1.0
        %v1289 = vsel %vm1273, %v1257, 1.0
        %v1290 = vsel %vm1274, %v1258, 1.0
        %v1291 = vsel %vm1275, %v1259, 1.0
        %v1292 = vsel %vm1276, %v1260, 1.0
        %v1293 = vsel %vm1277, %v1261, 1.0
        %v1294 = vsel %vm1278, %v1262, 1.0
        %v1295 = vsel %vm1279, %v1263, 1.0
        %v1296 = vsel %vm1280, %v1264, 1.0
        %v1297 = vsel %vm1281, %v1265, 1.0
        %v1298 = vrcp.pop %v1282
        %v1299 = vmul.f32 %v1282, %v1298
        %v1300 = vsub.f32 1.0, %v1299
        %v1301 = vmul.f32 %v1298, %v1300
        %v1302 = vadd.f32 %v1298, %v1301
        %vm1303 = vweird.f32 %v1282
        %vm1304 = vweird.f32 %v1298
        %vm1305 = vmor %vm1303, %vm1304
        %v1306 = vsel %vm1305, %v1298, %v1302
        %v1307 = vand.u32 2147483647, %v1282
        %vm1308 = vcmp.eq.f32.partialorder %v1307, 8.507059e+37
        %v1309 = vand.u32 %v1282, 2147483648
        %v1310 = vor.u32 1.1754944e-38, %v1309
        %v1311 = vsel %vm1308, %v1310, %v1306
        %v1312 = vrcp.pop %v1283
        %v1313 = vmul.f32 %v1283, %v1312
        %v1314 = vsub.f32 1.0, %v1313
        %v1315 = vmul.f32 %v1312, %v1314
        %v1316 = vadd.f32 %v1312, %v1315
        %vm1317 = vweird.f32 %v1283
        %vm1318 = vweird.f32 %v1312
        %vm1319 = vmor %vm1317, %vm1318
        %v1320 = vsel %vm1319, %v1312, %v1316
        %v1321 = vand.u32 2147483647, %v1283
        %vm1322 = vcmp.eq.f32.partialorder %v1321, 8.507059e+37
        %v1323 = vand.u32 %v1283, 2147483648
        %v1324 = vor.u32 1.1754944e-38, %v1323
        %v1325 = vsel %vm1322, %v1324, %v1320
        %v1326 = vrcp.pop %v1284
        %v1327 = vmul.f32 %v1284, %v1326
        %v1328 = vsub.f32 1.0, %v1327
        %v1329 = vmul.f32 %v1326, %v1328
        %v1330 = vadd.f32 %v1326, %v1329
        %vm1331 = vweird.f32 %v1284
        %vm1332 = vweird.f32 %v1326
        %vm1333 = vmor %vm1331, %vm1332
        %v1334 = vsel %vm1333, %v1326, %v1330
        %v1335 = vand.u32 2147483647, %v1284
        %vm1336 = vcmp.eq.f32.partialorder %v1335, 8.507059e+37
        %v1337 = vand.u32 %v1284, 2147483648
        %v1338 = vor.u32 1.1754944e-38, %v1337
        %v1339 = vsel %vm1336, %v1338, %v1334
        %v1340 = vrcp.pop %v1285
        %v1341 = vmul.f32 %v1285, %v1340
        %v1342 = vsub.f32 1.0, %v1341
        %v1343 = vmul.f32 %v1340, %v1342
        %v1344 = vadd.f32 %v1340, %v1343
        %vm1345 = vweird.f32 %v1285
        %vm1346 = vweird.f32 %v1340
        %vm1347 = vmor %vm1345, %vm1346
        %v1348 = vsel %vm1347, %v1340, %v1344
        %v1349 = vand.u32 2147483647, %v1285
        %vm1350 = vcmp.eq.f32.partialorder %v1349, 8.507059e+37
        %v1351 = vand.u32 %v1285, 2147483648
        %v1352 = vor.u32 1.1754944e-38, %v1351
        %v1353 = vsel %vm1350, %v1352, %v1348
        %v1354 = vrcp.pop %v1286
        %v1355 = vmul.f32 %v1286, %v1354
        %v1356 = vsub.f32 1.0, %v1355
        %v1357 = vmul.f32 %v1354, %v1356
        %v1358 = vadd.f32 %v1354, %v1357
        %vm1359 = vweird.f32 %v1286
        %vm1360 = vweird.f32 %v1354
        %vm1361 = vmor %vm1359, %vm1360
        %v1362 = vsel %vm1361, %v1354, %v1358
        %v1363 = vand.u32 2147483647, %v1286
        %vm1364 = vcmp.eq.f32.partialorder %v1363, 8.507059e+37
        %v1365 = vand.u32 %v1286, 2147483648
        %v1366 = vor.u32 1.1754944e-38, %v1365
        %v1367 = vsel %vm1364, %v1366, %v1362
        %v1368 = vrcp.pop %v1287
        %v1369 = vmul.f32 %v1287, %v1368
        %v1370 = vsub.f32 1.0, %v1369
        %v1371 = vmul.f32 %v1368, %v1370
        %v1372 = vadd.f32 %v1368, %v1371
        %vm1373 = vweird.f32 %v1287
        %vm1374 = vweird.f32 %v1368
        %vm1375 = vmor %vm1373, %vm1374
        %v1376 = vsel %vm1375, %v1368, %v1372
        %v1377 = vand.u32 2147483647, %v1287
        %vm1378 = vcmp.eq.f32.partialorder %v1377, 8.507059e+37
        %v1379 = vand.u32 %v1287, 2147483648
        %v1380 = vor.u32 1.1754944e-38, %v1379
        %v1381 = vsel %vm1378, %v1380, %v1376
        %v1382 = vrcp.pop %v1288
        %v1383 = vmul.f32 %v1288, %v1382
        %v1384 = vsub.f32 1.0, %v1383
        %v1385 = vmul.f32 %v1382, %v1384
        %v1386 = vadd.f32 %v1382, %v1385
        %vm1387 = vweird.f32 %v1288
        %vm1388 = vweird.f32 %v1382
        %vm1389 = vmor %vm1387, %vm1388
        %v1390 = vsel %vm1389, %v1382, %v1386
        %v1391 = vand.u32 2147483647, %v1288
        %vm1392 = vcmp.eq.f32.partialorder %v1391, 8.507059e+37
        %v1393 = vand.u32 %v1288, 2147483648
        %v1394 = vor.u32 1.1754944e-38, %v1393
        %v1395 = vsel %vm1392, %v1394, %v1390
        %v1396 = vrcp.pop %v1289
        %v1397 = vmul.f32 %v1289, %v1396
        %v1398 = vsub.f32 1.0, %v1397
        %v1399 = vmul.f32 %v1396, %v1398
        %v1400 = vadd.f32 %v1396, %v1399
        %vm1401 = vweird.f32 %v1289
        %vm1402 = vweird.f32 %v1396
        %vm1403 = vmor %vm1401, %vm1402
        %v1404 = vsel %vm1403, %v1396, %v1400
        %v1405 = vand.u32 2147483647, %v1289
        %vm1406 = vcmp.eq.f32.partialorder %v1405, 8.507059e+37
        %v1407 = vand.u32 %v1289, 2147483648
        %v1408 = vor.u32 1.1754944e-38, %v1407
        %v1409 = vsel %vm1406, %v1408, %v1404
        %v1410 = vrcp.pop %v1290
        %v1411 = vmul.f32 %v1290, %v1410
        %v1412 = vsub.f32 1.0, %v1411
        %v1413 = vmul.f32 %v1410, %v1412
        %v1414 = vadd.f32 %v1410, %v1413
        %vm1415 = vweird.f32 %v1290
        %vm1416 = vweird.f32 %v1410
        %vm1417 = vmor %vm1415, %vm1416
        %v1418 = vsel %vm1417, %v1410, %v1414
        %v1419 = vand.u32 2147483647, %v1290
        %vm1420 = vcmp.eq.f32.partialorder %v1419, 8.507059e+37
        %v1421 = vand.u32 %v1290, 2147483648
        %v1422 = vor.u32 1.1754944e-38, %v1421
        %v1423 = vsel %vm1420, %v1422, %v1418
        %v1424 = vrcp.pop %v1291
        %v1425 = vmul.f32 %v1291, %v1424
        %v1426 = vsub.f32 1.0, %v1425
        %v1427 = vmul.f32 %v1424, %v1426
        %v1428 = vadd.f32 %v1424, %v1427
        %vm1429 = vweird.f32 %v1291
        %vm1430 = vweird.f32 %v1424
        %vm1431 = vmor %vm1429, %vm1430
        %v1432 = vsel %vm1431, %v1424, %v1428
        %v1433 = vand.u32 2147483647, %v1291
        %vm1434 = vcmp.eq.f32.partialorder %v1433, 8.507059e+37
        %v1435 = vand.u32 %v1291, 2147483648
        %v1436 = vor.u32 1.1754944e-38, %v1435
        %v1437 = vsel %vm1434, %v1436, %v1432
        %v1438 = vrcp.pop %v1292
        %v1439 = vmul.f32 %v1292, %v1438
        %v1440 = vsub.f32 1.0, %v1439
        %v1441 = vmul.f32 %v1438, %v1440
        %v1442 = vadd.f32 %v1438, %v1441
        %vm1443 = vweird.f32 %v1292
        %vm1444 = vweird.f32 %v1438
        %vm1445 = vmor %vm1443, %vm1444
        %v1446 = vsel %vm1445, %v1438, %v1442
        %v1447 = vand.u32 2147483647, %v1292
        %vm1448 = vcmp.eq.f32.partialorder %v1447, 8.507059e+37
        %v1449 = vand.u32 %v1292, 2147483648
        %v1450 = vor.u32 1.1754944e-38, %v1449
        %v1451 = vsel %vm1448, %v1450, %v1446
        %v1452 = vrcp.pop %v1293
        %v1453 = vmul.f32 %v1293, %v1452
        %v1454 = vsub.f32 1.0, %v1453
        %v1455 = vmul.f32 %v1452, %v1454
        %v1456 = vadd.f32 %v1452, %v1455
        %vm1457 = vweird.f32 %v1293
        %vm1458 = vweird.f32 %v1452
        %vm1459 = vmor %vm1457, %vm1458
        %v1460 = vsel %vm1459, %v1452, %v1456
        %v1461 = vand.u32 2147483647, %v1293
        %vm1462 = vcmp.eq.f32.partialorder %v1461, 8.507059e+37
        %v1463 = vand.u32 %v1293, 2147483648
        %v1464 = vor.u32 1.1754944e-38, %v1463
        %v1465 = vsel %vm1462, %v1464, %v1460
        %v1466 = vrcp.pop %v1294
        %v1467 = vmul.f32 %v1294, %v1466
        %v1468 = vsub.f32 1.0, %v1467
        %v1469 = vmul.f32 %v1466, %v1468
        %v1470 = vadd.f32 %v1466, %v1469
        %vm1471 = vweird.f32 %v1294
        %vm1472 = vweird.f32 %v1466
        %vm1473 = vmor %vm1471, %vm1472
        %v1474 = vsel %vm1473, %v1466, %v1470
        %v1475 = vand.u32 2147483647, %v1294
        %vm1476 = vcmp.eq.f32.partialorder %v1475, 8.507059e+37
        %v1477 = vand.u32 %v1294, 2147483648
        %v1478 = vor.u32 1.1754944e-38, %v1477
        %v1479 = vsel %vm1476, %v1478, %v1474
        %v1480 = vrcp.pop %v1295
        %v1481 = vmul.f32 %v1295, %v1480
        %v1482 = vsub.f32 1.0, %v1481
        %v1483 = vmul.f32 %v1480, %v1482
        %v1484 = vadd.f32 %v1480, %v1483
        %vm1485 = vweird.f32 %v1295
        %vm1486 = vweird.f32 %v1480
        %vm1487 = vmor %vm1485, %vm1486
        %v1488 = vsel %vm1487, %v1480, %v1484
        %v1489 = vand.u32 2147483647, %v1295
        %vm1490 = vcmp.eq.f32.partialorder %v1489, 8.507059e+37
        %v1491 = vand.u32 %v1295, 2147483648
        %v1492 = vor.u32 1.1754944e-38, %v1491
        %v1493 = vsel %vm1490, %v1492, %v1488
        %v1494 = vrcp.pop %v1296
        %v1495 = vmul.f32 %v1296, %v1494
        %v1496 = vsub.f32 1.0, %v1495
        %v1497 = vmul.f32 %v1494, %v1496
        %v1498 = vadd.f32 %v1494, %v1497
        %vm1499 = vweird.f32 %v1296
        %vm1500 = vweird.f32 %v1494
        %vm1501 = vmor %vm1499, %vm1500
        %v1502 = vsel %vm1501, %v1494, %v1498
        %v1503 = vand.u32 2147483647, %v1296
        %vm1504 = vcmp.eq.f32.partialorder %v1503, 8.507059e+37
        %v1505 = vand.u32 %v1296, 2147483648
        %v1506 = vor.u32 1.1754944e-38, %v1505
        %v1507 = vsel %vm1504, %v1506, %v1502
        %v1508 = vrcp.pop %v1297
        %v1509 = vmul.f32 %v1297, %v1508
        %v1510 = vsub.f32 1.0, %v1509
        %v1511 = vmul.f32 %v1508, %v1510
        %v1512 = vadd.f32 %v1508, %v1511
        %vm1513 = vweird.f32 %v1297
        %vm1514 = vweird.f32 %v1508
        %vm1515 = vmor %vm1513, %vm1514
        %v1516 = vsel %vm1515, %v1508, %v1512
        %v1517 = vand.u32 2147483647, %v1297
        %vm1518 = vcmp.eq.f32.partialorder %v1517, 8.507059e+37
        %v1519 = vand.u32 %v1297, 2147483648
        %v1520 = vor.u32 1.1754944e-38, %v1519
        %v1521 = vsel %vm1518, %v1520, %v1516
        %v1522 = vmul.f32 %v1043, %v1311
        %v1523 = vmul.f32 %v1045, %v1325
        %v1524 = vmul.f32 %v1047, %v1339
        %v1525 = vmul.f32 %v1049, %v1353
        %v1526 = vmul.f32 %v1051, %v1367
        %v1527 = vmul.f32 %v1053, %v1381
        %v1528 = vmul.f32 %v1055, %v1395
        %v1529 = vmul.f32 %v1057, %v1409
        %v1530 = vmul.f32 %v1059, %v1423
        %v1531 = vmul.f32 %v1061, %v1437
        %v1532 = vmul.f32 %v1063, %v1451
        %v1533 = vmul.f32 %v1065, %v1465
        %v1534 = vmul.f32 %v1067, %v1479
        %v1535 = vmul.f32 %v1069, %v1493
        %v1536 = vmul.f32 %v1071, %v1507
        %v1537 = vmul.f32 %v1073, %v1521
        %v1538 = vld [vmem:[%s5] sm:$0xff]
        %v1539 = vld [vmem:[%s5 + $0x8] sm:$0xff]
        %v1540 = vld [vmem:[%s5 + $0x10] sm:$0xff]
        %v1541 = vld [vmem:[%s5 + $0x18] sm:$0xff]
        %v1542 = vld [vmem:[%s5 + $0x20] sm:$0xff]
        %v1543 = vld [vmem:[%s5 + $0x28] sm:$0xff]
        %v1544 = vld [vmem:[%s5 + $0x30] sm:$0xff]
        %v1545 = vld [vmem:[%s5 + $0x38] sm:$0xff]
        %v1546 = vld [vmem:[%s5 + $0x40] sm:$0xff]
        %v1547 = vld [vmem:[%s5 + $0x48] sm:$0xff]
        %v1548 = vld [vmem:[%s5 + $0x50] sm:$0xff]
        %v1549 = vld [vmem:[%s5 + $0x58] sm:$0xff]
        %v1550 = vld [vmem:[%s5 + $0x60] sm:$0xff]
        %v1551 = vld [vmem:[%s5 + $0x68] sm:$0xff]
        %v1552 = vld [vmem:[%s5 + $0x70] sm:$0xff]
        %v1553 = vld [vmem:[%s5 + $0x78] sm:$0xff]
        %v1554 = vld [vmem:[%s6] sm:$0xff]
        %v1555 = vld [vmem:[%s6 + $0x8] sm:$0xff]
        %v1556 = vld [vmem:[%s6 + $0x10] sm:$0xff]
        %v1557 = vld [vmem:[%s6 + $0x18] sm:$0xff]
        %v1558 = vld [vmem:[%s6 + $0x20] sm:$0xff]
        %v1559 = vld [vmem:[%s6 + $0x28] sm:$0xff]
        %v1560 = vld [vmem:[%s6 + $0x30] sm:$0xff]
        %v1561 = vld [vmem:[%s6 + $0x38] sm:$0xff]
        %v1562 = vld [vmem:[%s6 + $0x40] sm:$0xff]
        %v1563 = vld [vmem:[%s6 + $0x48] sm:$0xff]
        %v1564 = vld [vmem:[%s6 + $0x50] sm:$0xff]
        %v1565 = vld [vmem:[%s6 + $0x58] sm:$0xff]
        %v1566 = vld [vmem:[%s6 + $0x60] sm:$0xff]
        %v1567 = vld [vmem:[%s6 + $0x68] sm:$0xff]
        %v1568 = vld [vmem:[%s6 + $0x70] sm:$0xff]
        %v1569 = vld [vmem:[%s6 + $0x78] sm:$0xff]
        %vm1570 = vcmask 130048
        %v1572 = vsel %vm1570, %v1538, 0
        %v1575 = vsel %vm1570, %v1539, 0
        %v1578 = vsel %vm1570, %v1540, 0
        %v1581 = vsel %vm1570, %v1541, 0
        %v1584 = vsel %vm1570, %v1542, 0
        %v1587 = vsel %vm1570, %v1543, 0
        %v1590 = vsel %vm1570, %v1544, 0
        %v1593 = vsel %vm1570, %v1545, 0
        %v1596 = vsel %vm1570, %v1546, 0
        %v1599 = vsel %vm1570, %v1547, 0
        %v1602 = vsel %vm1570, %v1548, 0
        %v1605 = vsel %vm1570, %v1549, 0
        %v1608 = vsel %vm1570, %v1550, 0
        %v1611 = vsel %vm1570, %v1551, 0
        %v1614 = vsel %vm1570, %v1552, 0
        %v1617 = vsel %vm1570, %v1553, 0
        %1619 = vmatpush.msra.mxu0 0.0
        %1620 = vmatpush.msra.mxu0 0.0
        %1621 = vmatpush.msra.mxu0 0.0
        %1622 = vmatpush.msra.mxu0 0.0
        %1623 = vmatpush.msra.mxu0 0.0
        %1624 = vmatpush.msra.mxu0 0.0
        %1625 = vmatpush.msra.mxu0 0.0
        %1626 = vmatpush.msra.mxu0 0.0
        %1627 = vmatpush.msra.mxu0 0.0
        %1628 = vmatpush.msra.mxu0 0.0
        %1629 = vmatpush.msra.mxu0 0.0
        %1630 = vmatpush.msra.mxu0 0.0
        %1631 = vmatpush.msra.mxu0 0.0
        %1632 = vmatpush.msra.mxu0 0.0
        %1633 = vmatpush.msra.mxu0 %v549
        %1634 = vmatpush.msra.mxu0 %v546
        %1635 = vmatmul.f32.gmra.mxu0 %v1572
        %v1636 = vpop.f32.mrf.mxu0
        %v1637 = vadd.f32 0.0, %v1636
        %1638 = vmatmul.f32.gmra.mxu0 %v1575
        %v1639 = vpop.f32.mrf.mxu0
        %v1640 = vadd.f32 0.0, %v1639
        %1641 = vmatmul.f32.gmra.mxu0 %v1578
        %v1642 = vpop.f32.mrf.mxu0
        %v1643 = vadd.f32 0.0, %v1642
        %1644 = vmatmul.f32.gmra.mxu0 %v1581
        %v1645 = vpop.f32.mrf.mxu0
        %v1646 = vadd.f32 0.0, %v1645
        %1647 = vmatmul.f32.gmra.mxu0 %v1584
        %v1648 = vpop.f32.mrf.mxu0
        %v1649 = vadd.f32 0.0, %v1648
        %1650 = vmatmul.f32.gmra.mxu0 %v1587
        %v1651 = vpop.f32.mrf.mxu0
        %v1652 = vadd.f32 0.0, %v1651
        %1653 = vmatmul.f32.gmra.mxu0 %v1590
        %v1654 = vpop.f32.mrf.mxu0
        %v1655 = vadd.f32 0.0, %v1654
        %1656 = vmatmul.f32.gmra.mxu0 %v1593
        %v1657 = vpop.f32.mrf.mxu0
        %v1658 = vadd.f32 0.0, %v1657
        %1659 = vmatmul.f32.gmra.mxu0 %v1596
        %v1660 = vpop.f32.mrf.mxu0
        %v1661 = vadd.f32 0.0, %v1660
        %1662 = vmatmul.f32.gmra.mxu0 %v1599
        %v1663 = vpop.f32.mrf.mxu0
        %v1664 = vadd.f32 0.0, %v1663
        %1665 = vmatmul.f32.gmra.mxu0 %v1602
        %v1666 = vpop.f32.mrf.mxu0
        %v1667 = vadd.f32 0.0, %v1666
        %1668 = vmatmul.f32.gmra.mxu0 %v1605
        %v1669 = vpop.f32.mrf.mxu0
        %v1670 = vadd.f32 0.0, %v1669
        %1671 = vmatmul.f32.gmra.mxu0 %v1608
        %v1672 = vpop.f32.mrf.mxu0
        %v1673 = vadd.f32 0.0, %v1672
        %1674 = vmatmul.f32.gmra.mxu0 %v1611
        %v1675 = vpop.f32.mrf.mxu0
        %v1676 = vadd.f32 0.0, %v1675
        %1677 = vmatmul.f32.gmra.mxu0 %v1614
        %v1678 = vpop.f32.mrf.mxu0
        %v1679 = vadd.f32 0.0, %v1678
        %1680 = vmatmul.f32.gmra.mxu0 %v1617
        %v1681 = vpop.f32.mrf.mxu0
        %v1682 = vadd.f32 0.0, %v1681
        %1683 = vdwg.mxu0
        %v1684 = vmul.f32 %v1637, %v1554
        %v1685 = vmul.f32 %v1640, %v1555
        %v1686 = vmul.f32 %v1643, %v1556
        %v1687 = vmul.f32 %v1646, %v1557
        %v1688 = vmul.f32 %v1649, %v1558
        %v1689 = vmul.f32 %v1652, %v1559
        %v1690 = vmul.f32 %v1655, %v1560
        %v1691 = vmul.f32 %v1658, %v1561
        %v1692 = vmul.f32 %v1661, %v1562
        %v1693 = vmul.f32 %v1664, %v1563
        %v1694 = vmul.f32 %v1667, %v1564
        %v1695 = vmul.f32 %v1670, %v1565
        %v1696 = vmul.f32 %v1673, %v1566
        %v1697 = vmul.f32 %v1676, %v1567
        %v1698 = vmul.f32 %v1679, %v1568
        %v1699 = vmul.f32 %v1682, %v1569
        %1700 = vmatpush.msra.mxu0 %v1699
        %1701 = vmatpush.msra.mxu0 %v1698
        %1702 = vmatpush.msra.mxu0 %v1697
        %1703 = vmatpush.msra.mxu0 %v1696
        %1704 = vmatpush.msra.mxu0 %v1695
        %1705 = vmatpush.msra.mxu0 %v1694
        %1706 = vmatpush.msra.mxu0 %v1693
        %1707 = vmatpush.msra.mxu0 %v1692
        %1708 = vmatpush.msra.mxu0 %v1691
        %1709 = vmatpush.msra.mxu0 %v1690
        %1710 = vmatpush.msra.mxu0 %v1689
        %1711 = vmatpush.msra.mxu0 %v1688
        %1712 = vmatpush.msra.mxu0 %v1687
        %1713 = vmatpush.msra.mxu0 %v1686
        %1714 = vmatpush.msra.mxu0 %v1685
        %1715 = vmatpush.msra.mxu0 %v1684
        %1716 = vmatmul.f32.gmra.mxu0 %v1522
        %v1717 = vpop.f32.mrf.mxu0
        %v1718 = vadd.f32 0.0, %v1717
        %1719 = vmatmul.f32.gmra.mxu0 %v1523
        %v1720 = vpop.f32.mrf.mxu0
        %v1721 = vadd.f32 0.0, %v1720
        %1722 = vdwg.mxu0
        %1723 = vmatpush.msra.mxu0 0.0
        %1724 = vmatpush.msra.mxu0 0.0
        %1725 = vmatpush.msra.mxu0 0.0
        %1726 = vmatpush.msra.mxu0 0.0
        %1727 = vmatpush.msra.mxu0 0.0
        %1728 = vmatpush.msra.mxu0 0.0
        %1729 = vmatpush.msra.mxu0 0.0
        %1730 = vmatpush.msra.mxu0 0.0
        %1731 = vmatpush.msra.mxu0 0.0
        %1732 = vmatpush.msra.mxu0 0.0
        %1733 = vmatpush.msra.mxu0 0.0
        %1734 = vmatpush.msra.mxu0 0.0
        %1735 = vmatpush.msra.mxu0 0.0
        %1736 = vmatpush.msra.mxu0 0.0
        %1737 = vmatpush.msra.mxu0 %v555
        %1738 = vmatpush.msra.mxu0 %v552
        %1739 = vmatmul.f32.gmra.mxu0 %v1572
        %v1740 = vpop.f32.mrf.mxu0
        %v1741 = vadd.f32 0.0, %v1740
        %1742 = vmatmul.f32.gmra.mxu0 %v1575
        %v1743 = vpop.f32.mrf.mxu0
        %v1744 = vadd.f32 0.0, %v1743
        %1745 = vmatmul.f32.gmra.mxu0 %v1578
        %v1746 = vpop.f32.mrf.mxu0
        %v1747 = vadd.f32 0.0, %v1746
        %1748 = vmatmul.f32.gmra.mxu0 %v1581
        %v1749 = vpop.f32.mrf.mxu0
        %v1750 = vadd.f32 0.0, %v1749
        %1751 = vmatmul.f32.gmra.mxu0 %v1584
        %v1752 = vpop.f32.mrf.mxu0
        %v1753 = vadd.f32 0.0, %v1752
        %1754 = vmatmul.f32.gmra.mxu0 %v1587
        %v1755 = vpop.f32.mrf.mxu0
        %v1756 = vadd.f32 0.0, %v1755
        %1757 = vmatmul.f32.gmra.mxu0 %v1590
        %v1758 = vpop.f32.mrf.mxu0
        %v1759 = vadd.f32 0.0, %v1758
        %1760 = vmatmul.f32.gmra.mxu0 %v1593
        %v1761 = vpop.f32.mrf.mxu0
        %v1762 = vadd.f32 0.0, %v1761
        %1763 = vmatmul.f32.gmra.mxu0 %v1596
        %v1764 = vpop.f32.mrf.mxu0
        %v1765 = vadd.f32 0.0, %v1764
        %1766 = vmatmul.f32.gmra.mxu0 %v1599
        %v1767 = vpop.f32.mrf.mxu0
        %v1768 = vadd.f32 0.0, %v1767
        %1769 = vmatmul.f32.gmra.mxu0 %v1602
        %v1770 = vpop.f32.mrf.mxu0
        %v1771 = vadd.f32 0.0, %v1770
        %1772 = vmatmul.f32.gmra.mxu0 %v1605
        %v1773 = vpop.f32.mrf.mxu0
        %v1774 = vadd.f32 0.0, %v1773
        %1775 = vmatmul.f32.gmra.mxu0 %v1608
        %v1776 = vpop.f32.mrf.mxu0
        %v1777 = vadd.f32 0.0, %v1776
        %1778 = vmatmul.f32.gmra.mxu0 %v1611
        %v1779 = vpop.f32.mrf.mxu0
        %v1780 = vadd.f32 0.0, %v1779
        %1781 = vmatmul.f32.gmra.mxu0 %v1614
        %v1782 = vpop.f32.mrf.mxu0
        %v1783 = vadd.f32 0.0, %v1782
        %1784 = vmatmul.f32.gmra.mxu0 %v1617
        %v1785 = vpop.f32.mrf.mxu0
        %v1786 = vadd.f32 0.0, %v1785
        %1787 = vdwg.mxu0
        %v1788 = vmul.f32 %v1741, %v1554
        %v1789 = vmul.f32 %v1744, %v1555
        %v1790 = vmul.f32 %v1747, %v1556
        %v1791 = vmul.f32 %v1750, %v1557
        %v1792 = vmul.f32 %v1753, %v1558
        %v1793 = vmul.f32 %v1756, %v1559
        %v1794 = vmul.f32 %v1759, %v1560
        %v1795 = vmul.f32 %v1762, %v1561
        %v1796 = vmul.f32 %v1765, %v1562
        %v1797 = vmul.f32 %v1768, %v1563
        %v1798 = vmul.f32 %v1771, %v1564
        %v1799 = vmul.f32 %v1774, %v1565
        %v1800 = vmul.f32 %v1777, %v1566
        %v1801 = vmul.f32 %v1780, %v1567
        %v1802 = vmul.f32 %v1783, %v1568
        %v1803 = vmul.f32 %v1786, %v1569
        %1804 = vmatpush.msra.mxu0 %v1803
        %1805 = vmatpush.msra.mxu0 %v1802
        %1806 = vmatpush.msra.mxu0 %v1801
        %1807 = vmatpush.msra.mxu0 %v1800
        %1808 = vmatpush.msra.mxu0 %v1799
        %1809 = vmatpush.msra.mxu0 %v1798
        %1810 = vmatpush.msra.mxu0 %v1797
        %1811 = vmatpush.msra.mxu0 %v1796
        %1812 = vmatpush.msra.mxu0 %v1795
        %1813 = vmatpush.msra.mxu0 %v1794
        %1814 = vmatpush.msra.mxu0 %v1793
        %1815 = vmatpush.msra.mxu0 %v1792
        %1816 = vmatpush.msra.mxu0 %v1791
        %1817 = vmatpush.msra.mxu0 %v1790
        %1818 = vmatpush.msra.mxu0 %v1789
        %1819 = vmatpush.msra.mxu0 %v1788
        %1820 = vmatmul.f32.gmra.mxu0 %v1524
        %v1821 = vpop.f32.mrf.mxu0
        %v1822 = vadd.f32 0.0, %v1821
        %1823 = vmatmul.f32.gmra.mxu0 %v1525
        %v1824 = vpop.f32.mrf.mxu0
        %v1825 = vadd.f32 0.0, %v1824
        %1826 = vdwg.mxu0
        %1827 = vmatpush.msra.mxu0 0.0
        %1828 = vmatpush.msra.mxu0 0.0
        %1829 = vmatpush.msra.mxu0 0.0
        %1830 = vmatpush.msra.mxu0 0.0
        %1831 = vmatpush.msra.mxu0 0.0
        %1832 = vmatpush.msra.mxu0 0.0
        %1833 = vmatpush.msra.mxu0 0.0
        %1834 = vmatpush.msra.mxu0 0.0
        %1835 = vmatpush.msra.mxu0 0.0
        %1836 = vmatpush.msra.mxu0 0.0
        %1837 = vmatpush.msra.mxu0 0.0
        %1838 = vmatpush.msra.mxu0 0.0
        %1839 = vmatpush.msra.mxu0 0.0
        %1840 = vmatpush.msra.mxu0 0.0
        %1841 = vmatpush.msra.mxu0 %v561
        %1842 = vmatpush.msra.mxu0 %v558
        %1843 = vmatmul.f32.gmra.mxu0 %v1572
        %v1844 = vpop.f32.mrf.mxu0
        %v1845 = vadd.f32 0.0, %v1844
        %1846 = vmatmul.f32.gmra.mxu0 %v1575
        %v1847 = vpop.f32.mrf.mxu0
        %v1848 = vadd.f32 0.0, %v1847
        %1849 = vmatmul.f32.gmra.mxu0 %v1578
        %v1850 = vpop.f32.mrf.mxu0
        %v1851 = vadd.f32 0.0, %v1850
        %1852 = vmatmul.f32.gmra.mxu0 %v1581
        %v1853 = vpop.f32.mrf.mxu0
        %v1854 = vadd.f32 0.0, %v1853
        %1855 = vmatmul.f32.gmra.mxu0 %v1584
        %v1856 = vpop.f32.mrf.mxu0
        %v1857 = vadd.f32 0.0, %v1856
        %1858 = vmatmul.f32.gmra.mxu0 %v1587
        %v1859 = vpop.f32.mrf.mxu0
        %v1860 = vadd.f32 0.0, %v1859
        %1861 = vmatmul.f32.gmra.mxu0 %v1590
        %v1862 = vpop.f32.mrf.mxu0
        %v1863 = vadd.f32 0.0, %v1862
        %1864 = vmatmul.f32.gmra.mxu0 %v1593
        %v1865 = vpop.f32.mrf.mxu0
        %v1866 = vadd.f32 0.0, %v1865
        %1867 = vmatmul.f32.gmra.mxu0 %v1596
        %v1868 = vpop.f32.mrf.mxu0
        %v1869 = vadd.f32 0.0, %v1868
        %1870 = vmatmul.f32.gmra.mxu0 %v1599
        %v1871 = vpop.f32.mrf.mxu0
        %v1872 = vadd.f32 0.0, %v1871
        %1873 = vmatmul.f32.gmra.mxu0 %v1602
        %v1874 = vpop.f32.mrf.mxu0
        %v1875 = vadd.f32 0.0, %v1874
        %1876 = vmatmul.f32.gmra.mxu0 %v1605
        %v1877 = vpop.f32.mrf.mxu0
        %v1878 = vadd.f32 0.0, %v1877
        %1879 = vmatmul.f32.gmra.mxu0 %v1608
        %v1880 = vpop.f32.mrf.mxu0
        %v1881 = vadd.f32 0.0, %v1880
        %1882 = vmatmul.f32.gmra.mxu0 %v1611
        %v1883 = vpop.f32.mrf.mxu0
        %v1884 = vadd.f32 0.0, %v1883
        %1885 = vmatmul.f32.gmra.mxu0 %v1614
        %v1886 = vpop.f32.mrf.mxu0
        %v1887 = vadd.f32 0.0, %v1886
        %1888 = vmatmul.f32.gmra.mxu0 %v1617
        %v1889 = vpop.f32.mrf.mxu0
        %v1890 = vadd.f32 0.0, %v1889
        %1891 = vdwg.mxu0
        %v1892 = vmul.f32 %v1845, %v1554
        %v1893 = vmul.f32 %v1848, %v1555
        %v1894 = vmul.f32 %v1851, %v1556
        %v1895 = vmul.f32 %v1854, %v1557
        %v1896 = vmul.f32 %v1857, %v1558
        %v1897 = vmul.f32 %v1860, %v1559
        %v1898 = vmul.f32 %v1863, %v1560
        %v1899 = vmul.f32 %v1866, %v1561
        %v1900 = vmul.f32 %v1869, %v1562
        %v1901 = vmul.f32 %v1872, %v1563
        %v1902 = vmul.f32 %v1875, %v1564
        %v1903 = vmul.f32 %v1878, %v1565
        %v1904 = vmul.f32 %v1881, %v1566
        %v1905 = vmul.f32 %v1884, %v1567
        %v1906 = vmul.f32 %v1887, %v1568
        %v1907 = vmul.f32 %v1890, %v1569
        %1908 = vmatpush.msra.mxu0 %v1907
        %1909 = vmatpush.msra.mxu0 %v1906
        %1910 = vmatpush.msra.mxu0 %v1905
        %1911 = vmatpush.msra.mxu0 %v1904
        %1912 = vmatpush.msra.mxu0 %v1903
        %1913 = vmatpush.msra.mxu0 %v1902
        %1914 = vmatpush.msra.mxu0 %v1901
        %1915 = vmatpush.msra.mxu0 %v1900
        %1916 = vmatpush.msra.mxu0 %v1899
        %1917 = vmatpush.msra.mxu0 %v1898
        %1918 = vmatpush.msra.mxu0 %v1897
        %1919 = vmatpush.msra.mxu0 %v1896
        %1920 = vmatpush.msra.mxu0 %v1895
        %1921 = vmatpush.msra.mxu0 %v1894
        %1922 = vmatpush.msra.mxu0 %v1893
        %1923 = vmatpush.msra.mxu0 %v1892
        %1924 = vmatmul.f32.gmra.mxu0 %v1526
        %v1925 = vpop.f32.mrf.mxu0
        %v1926 = vadd.f32 0.0, %v1925
        %1927 = vmatmul.f32.gmra.mxu0 %v1527
        %v1928 = vpop.f32.mrf.mxu0
        %v1929 = vadd.f32 0.0, %v1928
        %1930 = vdwg.mxu0
        %1931 = vmatpush.msra.mxu0 0.0
        %1932 = vmatpush.msra.mxu0 0.0
        %1933 = vmatpush.msra.mxu0 0.0
        %1934 = vmatpush.msra.mxu0 0.0
        %1935 = vmatpush.msra.mxu0 0.0
        %1936 = vmatpush.msra.mxu0 0.0
        %1937 = vmatpush.msra.mxu0 0.0
        %1938 = vmatpush.msra.mxu0 0.0
        %1939 = vmatpush.msra.mxu0 0.0
        %1940 = vmatpush.msra.mxu0 0.0
        %1941 = vmatpush.msra.mxu0 0.0
        %1942 = vmatpush.msra.mxu0 0.0
        %1943 = vmatpush.msra.mxu0 0.0
        %1944 = vmatpush.msra.mxu0 0.0
        %1945 = vmatpush.msra.mxu0 %v567
        %1946 = vmatpush.msra.mxu0 %v564
        %1947 = vmatmul.f32.gmra.mxu0 %v1572
        %v1948 = vpop.f32.mrf.mxu0
        %v1949 = vadd.f32 0.0, %v1948
        %1950 = vmatmul.f32.gmra.mxu0 %v1575
        %v1951 = vpop.f32.mrf.mxu0
        %v1952 = vadd.f32 0.0, %v1951
        %1953 = vmatmul.f32.gmra.mxu0 %v1578
        %v1954 = vpop.f32.mrf.mxu0
        %v1955 = vadd.f32 0.0, %v1954
        %1956 = vmatmul.f32.gmra.mxu0 %v1581
        %v1957 = vpop.f32.mrf.mxu0
        %v1958 = vadd.f32 0.0, %v1957
        %1959 = vmatmul.f32.gmra.mxu0 %v1584
        %v1960 = vpop.f32.mrf.mxu0
        %v1961 = vadd.f32 0.0, %v1960
        %1962 = vmatmul.f32.gmra.mxu0 %v1587
        %v1963 = vpop.f32.mrf.mxu0
        %v1964 = vadd.f32 0.0, %v1963
        %1965 = vmatmul.f32.gmra.mxu0 %v1590
        %v1966 = vpop.f32.mrf.mxu0
        %v1967 = vadd.f32 0.0, %v1966
        %1968 = vmatmul.f32.gmra.mxu0 %v1593
        %v1969 = vpop.f32.mrf.mxu0
        %v1970 = vadd.f32 0.0, %v1969
        %1971 = vmatmul.f32.gmra.mxu0 %v1596
        %v1972 = vpop.f32.mrf.mxu0
        %v1973 = vadd.f32 0.0, %v1972
        %1974 = vmatmul.f32.gmra.mxu0 %v1599
        %v1975 = vpop.f32.mrf.mxu0
        %v1976 = vadd.f32 0.0, %v1975
        %1977 = vmatmul.f32.gmra.mxu0 %v1602
        %v1978 = vpop.f32.mrf.mxu0
        %v1979 = vadd.f32 0.0, %v1978
        %1980 = vmatmul.f32.gmra.mxu0 %v1605
        %v1981 = vpop.f32.mrf.mxu0
        %v1982 = vadd.f32 0.0, %v1981
        %1983 = vmatmul.f32.gmra.mxu0 %v1608
        %v1984 = vpop.f32.mrf.mxu0
        %v1985 = vadd.f32 0.0, %v1984
        %1986 = vmatmul.f32.gmra.mxu0 %v1611
        %v1987 = vpop.f32.mrf.mxu0
        %v1988 = vadd.f32 0.0, %v1987
        %1989 = vmatmul.f32.gmra.mxu0 %v1614
        %v1990 = vpop.f32.mrf.mxu0
        %v1991 = vadd.f32 0.0, %v1990
        %1992 = vmatmul.f32.gmra.mxu0 %v1617
        %v1993 = vpop.f32.mrf.mxu0
        %v1994 = vadd.f32 0.0, %v1993
        %1995 = vdwg.mxu0
        %v1996 = vmul.f32 %v1949, %v1554
        %v1997 = vmul.f32 %v1952, %v1555
        %v1998 = vmul.f32 %v1955, %v1556
        %v1999 = vmul.f32 %v1958, %v1557
        %v2000 = vmul.f32 %v1961, %v1558
        %v2001 = vmul.f32 %v1964, %v1559
        %v2002 = vmul.f32 %v1967, %v1560
        %v2003 = vmul.f32 %v1970, %v1561
        %v2004 = vmul.f32 %v1973, %v1562
        %v2005 = vmul.f32 %v1976, %v1563
        %v2006 = vmul.f32 %v1979, %v1564
        %v2007 = vmul.f32 %v1982, %v1565
        %v2008 = vmul.f32 %v1985, %v1566
        %v2009 = vmul.f32 %v1988, %v1567
        %v2010 = vmul.f32 %v1991, %v1568
        %v2011 = vmul.f32 %v1994, %v1569
        %2012 = vmatpush.msra.mxu0 %v2011
        %2013 = vmatpush.msra.mxu0 %v2010
        %2014 = vmatpush.msra.mxu0 %v2009
        %2015 = vmatpush.msra.mxu0 %v2008
        %2016 = vmatpush.msra.mxu0 %v2007
        %2017 = vmatpush.msra.mxu0 %v2006
        %2018 = vmatpush.msra.mxu0 %v2005
        %2019 = vmatpush.msra.mxu0 %v2004
        %2020 = vmatpush.msra.mxu0 %v2003
        %2021 = vmatpush.msra.mxu0 %v2002
        %2022 = vmatpush.msra.mxu0 %v2001
        %2023 = vmatpush.msra.mxu0 %v2000
        %2024 = vmatpush.msra.mxu0 %v1999
        %2025 = vmatpush.msra.mxu0 %v1998
        %2026 = vmatpush.msra.mxu0 %v1997
        %2027 = vmatpush.msra.mxu0 %v1996
        %2028 = vmatmul.f32.gmra.mxu0 %v1528
        %v2029 = vpop.f32.mrf.mxu0
        %v2030 = vadd.f32 0.0, %v2029
        %2031 = vmatmul.f32.gmra.mxu0 %v1529
        %v2032 = vpop.f32.mrf.mxu0
        %v2033 = vadd.f32 0.0, %v2032
        %2034 = vdwg.mxu0
        %2035 = vmatpush.msra.mxu0 0.0
        %2036 = vmatpush.msra.mxu0 0.0
        %2037 = vmatpush.msra.mxu0 0.0
        %2038 = vmatpush.msra.mxu0 0.0
        %2039 = vmatpush.msra.mxu0 0.0
        %2040 = vmatpush.msra.mxu0 0.0
        %2041 = vmatpush.msra.mxu0 0.0
        %2042 = vmatpush.msra.mxu0 0.0
        %2043 = vmatpush.msra.mxu0 0.0
        %2044 = vmatpush.msra.mxu0 0.0
        %2045 = vmatpush.msra.mxu0 0.0
        %2046 = vmatpush.msra.mxu0 0.0
        %2047 = vmatpush.msra.mxu0 0.0
        %2048 = vmatpush.msra.mxu0 0.0
        %2049 = vmatpush.msra.mxu0 %v573
        %2050 = vmatpush.msra.mxu0 %v570
        %2051 = vmatmul.f32.gmra.mxu0 %v1572
        %v2052 = vpop.f32.mrf.mxu0
        %v2053 = vadd.f32 0.0, %v2052
        %2054 = vmatmul.f32.gmra.mxu0 %v1575
        %v2055 = vpop.f32.mrf.mxu0
        %v2056 = vadd.f32 0.0, %v2055
        %2057 = vmatmul.f32.gmra.mxu0 %v1578
        %v2058 = vpop.f32.mrf.mxu0
        %v2059 = vadd.f32 0.0, %v2058
        %2060 = vmatmul.f32.gmra.mxu0 %v1581
        %v2061 = vpop.f32.mrf.mxu0
        %v2062 = vadd.f32 0.0, %v2061
        %2063 = vmatmul.f32.gmra.mxu0 %v1584
        %v2064 = vpop.f32.mrf.mxu0
        %v2065 = vadd.f32 0.0, %v2064
        %2066 = vmatmul.f32.gmra.mxu0 %v1587
        %v2067 = vpop.f32.mrf.mxu0
        %v2068 = vadd.f32 0.0, %v2067
        %2069 = vmatmul.f32.gmra.mxu0 %v1590
        %v2070 = vpop.f32.mrf.mxu0
        %v2071 = vadd.f32 0.0, %v2070
        %2072 = vmatmul.f32.gmra.mxu0 %v1593
        %v2073 = vpop.f32.mrf.mxu0
        %v2074 = vadd.f32 0.0, %v2073
        %2075 = vmatmul.f32.gmra.mxu0 %v1596
        %v2076 = vpop.f32.mrf.mxu0
        %v2077 = vadd.f32 0.0, %v2076
        %2078 = vmatmul.f32.gmra.mxu0 %v1599
        %v2079 = vpop.f32.mrf.mxu0
        %v2080 = vadd.f32 0.0, %v2079
        %2081 = vmatmul.f32.gmra.mxu0 %v1602
        %v2082 = vpop.f32.mrf.mxu0
        %v2083 = vadd.f32 0.0, %v2082
        %2084 = vmatmul.f32.gmra.mxu0 %v1605
        %v2085 = vpop.f32.mrf.mxu0
        %v2086 = vadd.f32 0.0, %v2085
        %2087 = vmatmul.f32.gmra.mxu0 %v1608
        %v2088 = vpop.f32.mrf.mxu0
        %v2089 = vadd.f32 0.0, %v2088
        %2090 = vmatmul.f32.gmra.mxu0 %v1611
        %v2091 = vpop.f32.mrf.mxu0
        %v2092 = vadd.f32 0.0, %v2091
        %2093 = vmatmul.f32.gmra.mxu0 %v1614
        %v2094 = vpop.f32.mrf.mxu0
        %v2095 = vadd.f32 0.0, %v2094
        %2096 = vmatmul.f32.gmra.mxu0 %v1617
        %v2097 = vpop.f32.mrf.mxu0
        %v2098 = vadd.f32 0.0, %v2097
        %2099 = vdwg.mxu0
        %v2100 = vmul.f32 %v2053, %v1554
        %v2101 = vmul.f32 %v2056, %v1555
        %v2102 = vmul.f32 %v2059, %v1556
        %v2103 = vmul.f32 %v2062, %v1557
        %v2104 = vmul.f32 %v2065, %v1558
        %v2105 = vmul.f32 %v2068, %v1559
        %v2106 = vmul.f32 %v2071, %v1560
        %v2107 = vmul.f32 %v2074, %v1561
        %v2108 = vmul.f32 %v2077, %v1562
        %v2109 = vmul.f32 %v2080, %v1563
        %v2110 = vmul.f32 %v2083, %v1564
        %v2111 = vmul.f32 %v2086, %v1565
        %v2112 = vmul.f32 %v2089, %v1566
        %v2113 = vmul.f32 %v2092, %v1567
        %v2114 = vmul.f32 %v2095, %v1568
        %v2115 = vmul.f32 %v2098, %v1569
        %2116 = vmatpush.msra.mxu0 %v2115
        %2117 = vmatpush.msra.mxu0 %v2114
        %2118 = vmatpush.msra.mxu0 %v2113
        %2119 = vmatpush.msra.mxu0 %v2112
        %2120 = vmatpush.msra.mxu0 %v2111
        %2121 = vmatpush.msra.mxu0 %v2110
        %2122 = vmatpush.msra.mxu0 %v2109
        %2123 = vmatpush.msra.mxu0 %v2108
        %2124 = vmatpush.msra.mxu0 %v2107
        %2125 = vmatpush.msra.mxu0 %v2106
        %2126 = vmatpush.msra.mxu0 %v2105
        %2127 = vmatpush.msra.mxu0 %v2104
        %2128 = vmatpush.msra.mxu0 %v2103
        %2129 = vmatpush.msra.mxu0 %v2102
        %2130 = vmatpush.msra.mxu0 %v2101
        %2131 = vmatpush.msra.mxu0 %v2100
        %2132 = vmatmul.f32.gmra.mxu0 %v1530
        %v2133 = vpop.f32.mrf.mxu0
        %v2134 = vadd.f32 0.0, %v2133
        %2135 = vmatmul.f32.gmra.mxu0 %v1531
        %v2136 = vpop.f32.mrf.mxu0
        %v2137 = vadd.f32 0.0, %v2136
        %2138 = vdwg.mxu0
        %2139 = vmatpush.msra.mxu0 0.0
        %2140 = vmatpush.msra.mxu0 0.0
        %2141 = vmatpush.msra.mxu0 0.0
        %2142 = vmatpush.msra.mxu0 0.0
        %2143 = vmatpush.msra.mxu0 0.0
        %2144 = vmatpush.msra.mxu0 0.0
        %2145 = vmatpush.msra.mxu0 0.0
        %2146 = vmatpush.msra.mxu0 0.0
        %2147 = vmatpush.msra.mxu0 0.0
        %2148 = vmatpush.msra.mxu0 0.0
        %2149 = vmatpush.msra.mxu0 0.0
        %2150 = vmatpush.msra.mxu0 0.0
        %2151 = vmatpush.msra.mxu0 0.0
        %2152 = vmatpush.msra.mxu0 0.0
        %2153 = vmatpush.msra.mxu0 %v579
        %2154 = vmatpush.msra.mxu0 %v576
        %2155 = vmatmul.f32.gmra.mxu0 %v1572
        %v2156 = vpop.f32.mrf.mxu0
        %v2157 = vadd.f32 0.0, %v2156
        %2158 = vmatmul.f32.gmra.mxu0 %v1575
        %v2159 = vpop.f32.mrf.mxu0
        %v2160 = vadd.f32 0.0, %v2159
        %2161 = vmatmul.f32.gmra.mxu0 %v1578
        %v2162 = vpop.f32.mrf.mxu0
        %v2163 = vadd.f32 0.0, %v2162
        %2164 = vmatmul.f32.gmra.mxu0 %v1581
        %v2165 = vpop.f32.mrf.mxu0
        %v2166 = vadd.f32 0.0, %v2165
        %2167 = vmatmul.f32.gmra.mxu0 %v1584
        %v2168 = vpop.f32.mrf.mxu0
        %v2169 = vadd.f32 0.0, %v2168
        %2170 = vmatmul.f32.gmra.mxu0 %v1587
        %v2171 = vpop.f32.mrf.mxu0
        %v2172 = vadd.f32 0.0, %v2171
        %2173 = vmatmul.f32.gmra.mxu0 %v1590
        %v2174 = vpop.f32.mrf.mxu0
        %v2175 = vadd.f32 0.0, %v2174
        %2176 = vmatmul.f32.gmra.mxu0 %v1593
        %v2177 = vpop.f32.mrf.mxu0
        %v2178 = vadd.f32 0.0, %v2177
        %2179 = vmatmul.f32.gmra.mxu0 %v1596
        %v2180 = vpop.f32.mrf.mxu0
        %v2181 = vadd.f32 0.0, %v2180
        %2182 = vmatmul.f32.gmra.mxu0 %v1599
        %v2183 = vpop.f32.mrf.mxu0
        %v2184 = vadd.f32 0.0, %v2183
        %2185 = vmatmul.f32.gmra.mxu0 %v1602
        %v2186 = vpop.f32.mrf.mxu0
        %v2187 = vadd.f32 0.0, %v2186
        %2188 = vmatmul.f32.gmra.mxu0 %v1605
        %v2189 = vpop.f32.mrf.mxu0
        %v2190 = vadd.f32 0.0, %v2189
        %2191 = vmatmul.f32.gmra.mxu0 %v1608
        %v2192 = vpop.f32.mrf.mxu0
        %v2193 = vadd.f32 0.0, %v2192
        %2194 = vmatmul.f32.gmra.mxu0 %v1611
        %v2195 = vpop.f32.mrf.mxu0
        %v2196 = vadd.f32 0.0, %v2195
        %2197 = vmatmul.f32.gmra.mxu0 %v1614
        %v2198 = vpop.f32.mrf.mxu0
        %v2199 = vadd.f32 0.0, %v2198
        %2200 = vmatmul.f32.gmra.mxu0 %v1617
        %v2201 = vpop.f32.mrf.mxu0
        %v2202 = vadd.f32 0.0, %v2201
        %2203 = vdwg.mxu0
        %v2204 = vmul.f32 %v2157, %v1554
        %v2205 = vmul.f32 %v2160, %v1555
        %v2206 = vmul.f32 %v2163, %v1556
        %v2207 = vmul.f32 %v2166, %v1557
        %v2208 = vmul.f32 %v2169, %v1558
        %v2209 = vmul.f32 %v2172, %v1559
        %v2210 = vmul.f32 %v2175, %v1560
        %v2211 = vmul.f32 %v2178, %v1561
        %v2212 = vmul.f32 %v2181, %v1562
        %v2213 = vmul.f32 %v2184, %v1563
        %v2214 = vmul.f32 %v2187, %v1564
        %v2215 = vmul.f32 %v2190, %v1565
        %v2216 = vmul.f32 %v2193, %v1566
        %v2217 = vmul.f32 %v2196, %v1567
        %v2218 = vmul.f32 %v2199, %v1568
        %v2219 = vmul.f32 %v2202, %v1569
        %2220 = vmatpush.msra.mxu0 %v2219
        %2221 = vmatpush.msra.mxu0 %v2218
        %2222 = vmatpush.msra.mxu0 %v2217
        %2223 = vmatpush.msra.mxu0 %v2216
        %2224 = vmatpush.msra.mxu0 %v2215
        %2225 = vmatpush.msra.mxu0 %v2214
        %2226 = vmatpush.msra.mxu0 %v2213
        %2227 = vmatpush.msra.mxu0 %v2212
        %2228 = vmatpush.msra.mxu0 %v2211
        %2229 = vmatpush.msra.mxu0 %v2210
        %2230 = vmatpush.msra.mxu0 %v2209
        %2231 = vmatpush.msra.mxu0 %v2208
        %2232 = vmatpush.msra.mxu0 %v2207
        %2233 = vmatpush.msra.mxu0 %v2206
        %2234 = vmatpush.msra.mxu0 %v2205
        %2235 = vmatpush.msra.mxu0 %v2204
        %2236 = vmatmul.f32.gmra.mxu0 %v1532
        %v2237 = vpop.f32.mrf.mxu0
        %v2238 = vadd.f32 0.0, %v2237
        %2239 = vmatmul.f32.gmra.mxu0 %v1533
        %v2240 = vpop.f32.mrf.mxu0
        %v2241 = vadd.f32 0.0, %v2240
        %2242 = vdwg.mxu0
        %2243 = vmatpush.msra.mxu0 0.0
        %2244 = vmatpush.msra.mxu0 0.0
        %2245 = vmatpush.msra.mxu0 0.0
        %2246 = vmatpush.msra.mxu0 0.0
        %2247 = vmatpush.msra.mxu0 0.0
        %2248 = vmatpush.msra.mxu0 0.0
        %2249 = vmatpush.msra.mxu0 0.0
        %2250 = vmatpush.msra.mxu0 0.0
        %2251 = vmatpush.msra.mxu0 0.0
        %2252 = vmatpush.msra.mxu0 0.0
        %2253 = vmatpush.msra.mxu0 0.0
        %2254 = vmatpush.msra.mxu0 0.0
        %2255 = vmatpush.msra.mxu0 0.0
        %2256 = vmatpush.msra.mxu0 0.0
        %2257 = vmatpush.msra.mxu0 %v585
        %2258 = vmatpush.msra.mxu0 %v582
        %2259 = vmatmul.f32.gmra.mxu0 %v1572
        %v2260 = vpop.f32.mrf.mxu0
        %v2261 = vadd.f32 0.0, %v2260
        %2262 = vmatmul.f32.gmra.mxu0 %v1575
        %v2263 = vpop.f32.mrf.mxu0
        %v2264 = vadd.f32 0.0, %v2263
        %2265 = vmatmul.f32.gmra.mxu0 %v1578
        %v2266 = vpop.f32.mrf.mxu0
        %v2267 = vadd.f32 0.0, %v2266
        %2268 = vmatmul.f32.gmra.mxu0 %v1581
        %v2269 = vpop.f32.mrf.mxu0
        %v2270 = vadd.f32 0.0, %v2269
        %2271 = vmatmul.f32.gmra.mxu0 %v1584
        %v2272 = vpop.f32.mrf.mxu0
        %v2273 = vadd.f32 0.0, %v2272
        %2274 = vmatmul.f32.gmra.mxu0 %v1587
        %v2275 = vpop.f32.mrf.mxu0
        %v2276 = vadd.f32 0.0, %v2275
        %2277 = vmatmul.f32.gmra.mxu0 %v1590
        %v2278 = vpop.f32.mrf.mxu0
        %v2279 = vadd.f32 0.0, %v2278
        %2280 = vmatmul.f32.gmra.mxu0 %v1593
        %v2281 = vpop.f32.mrf.mxu0
        %v2282 = vadd.f32 0.0, %v2281
        %2283 = vmatmul.f32.gmra.mxu0 %v1596
        %v2284 = vpop.f32.mrf.mxu0
        %v2285 = vadd.f32 0.0, %v2284
        %2286 = vmatmul.f32.gmra.mxu0 %v1599
        %v2287 = vpop.f32.mrf.mxu0
        %v2288 = vadd.f32 0.0, %v2287
        %2289 = vmatmul.f32.gmra.mxu0 %v1602
        %v2290 = vpop.f32.mrf.mxu0
        %v2291 = vadd.f32 0.0, %v2290
        %2292 = vmatmul.f32.gmra.mxu0 %v1605
        %v2293 = vpop.f32.mrf.mxu0
        %v2294 = vadd.f32 0.0, %v2293
        %2295 = vmatmul.f32.gmra.mxu0 %v1608
        %v2296 = vpop.f32.mrf.mxu0
        %v2297 = vadd.f32 0.0, %v2296
        %2298 = vmatmul.f32.gmra.mxu0 %v1611
        %v2299 = vpop.f32.mrf.mxu0
        %v2300 = vadd.f32 0.0, %v2299
        %2301 = vmatmul.f32.gmra.mxu0 %v1614
        %v2302 = vpop.f32.mrf.mxu0
        %v2303 = vadd.f32 0.0, %v2302
        %2304 = vmatmul.f32.gmra.mxu0 %v1617
        %v2305 = vpop.f32.mrf.mxu0
        %v2306 = vadd.f32 0.0, %v2305
        %2307 = vdwg.mxu0
        %v2308 = vmul.f32 %v2261, %v1554
        %v2309 = vmul.f32 %v2264, %v1555
        %v2310 = vmul.f32 %v2267, %v1556
        %v2311 = vmul.f32 %v2270, %v1557
        %v2312 = vmul.f32 %v2273, %v1558
        %v2313 = vmul.f32 %v2276, %v1559
        %v2314 = vmul.f32 %v2279, %v1560
        %v2315 = vmul.f32 %v2282, %v1561
        %v2316 = vmul.f32 %v2285, %v1562
        %v2317 = vmul.f32 %v2288, %v1563
        %v2318 = vmul.f32 %v2291, %v1564
        %v2319 = vmul.f32 %v2294, %v1565
        %v2320 = vmul.f32 %v2297, %v1566
        %v2321 = vmul.f32 %v2300, %v1567
        %v2322 = vmul.f32 %v2303, %v1568
        %v2323 = vmul.f32 %v2306, %v1569
        %2324 = vmatpush.msra.mxu0 %v2323
        %2325 = vmatpush.msra.mxu0 %v2322
        %2326 = vmatpush.msra.mxu0 %v2321
        %2327 = vmatpush.msra.mxu0 %v2320
        %2328 = vmatpush.msra.mxu0 %v2319
        %2329 = vmatpush.msra.mxu0 %v2318
        %2330 = vmatpush.msra.mxu0 %v2317
        %2331 = vmatpush.msra.mxu0 %v2316
        %2332 = vmatpush.msra.mxu0 %v2315
        %2333 = vmatpush.msra.mxu0 %v2314
        %2334 = vmatpush.msra.mxu0 %v2313
        %2335 = vmatpush.msra.mxu0 %v2312
        %2336 = vmatpush.msra.mxu0 %v2311
        %2337 = vmatpush.msra.mxu0 %v2310
        %2338 = vmatpush.msra.mxu0 %v2309
        %2339 = vmatpush.msra.mxu0 %v2308
        %2340 = vmatmul.f32.gmra.mxu0 %v1534
        %v2341 = vpop.f32.mrf.mxu0
        %v2342 = vadd.f32 0.0, %v2341
        %2343 = vmatmul.f32.gmra.mxu0 %v1535
        %v2344 = vpop.f32.mrf.mxu0
        %v2345 = vadd.f32 0.0, %v2344
        %2346 = vdwg.mxu0
        %2347 = vmatpush.msra.mxu0 0.0
        %2348 = vmatpush.msra.mxu0 0.0
        %2349 = vmatpush.msra.mxu0 0.0
        %2350 = vmatpush.msra.mxu0 0.0
        %2351 = vmatpush.msra.mxu0 0.0
        %2352 = vmatpush.msra.mxu0 0.0
        %2353 = vmatpush.msra.mxu0 0.0
        %2354 = vmatpush.msra.mxu0 0.0
        %2355 = vmatpush.msra.mxu0 0.0
        %2356 = vmatpush.msra.mxu0 0.0
        %2357 = vmatpush.msra.mxu0 0.0
        %2358 = vmatpush.msra.mxu0 0.0
        %2359 = vmatpush.msra.mxu0 0.0
        %2360 = vmatpush.msra.mxu0 0.0
        %2361 = vmatpush.msra.mxu0 %v591
        %2362 = vmatpush.msra.mxu0 %v588
        %2363 = vmatmul.f32.gmra.mxu0 %v1572
        %v2364 = vpop.f32.mrf.mxu0
        %v2365 = vadd.f32 0.0, %v2364
        %2366 = vmatmul.f32.gmra.mxu0 %v1575
        %v2367 = vpop.f32.mrf.mxu0
        %v2368 = vadd.f32 0.0, %v2367
        %2369 = vmatmul.f32.gmra.mxu0 %v1578
        %v2370 = vpop.f32.mrf.mxu0
        %v2371 = vadd.f32 0.0, %v2370
        %2372 = vmatmul.f32.gmra.mxu0 %v1581
        %v2373 = vpop.f32.mrf.mxu0
        %v2374 = vadd.f32 0.0, %v2373
        %2375 = vmatmul.f32.gmra.mxu0 %v1584
        %v2376 = vpop.f32.mrf.mxu0
        %v2377 = vadd.f32 0.0, %v2376
        %2378 = vmatmul.f32.gmra.mxu0 %v1587
        %v2379 = vpop.f32.mrf.mxu0
        %v2380 = vadd.f32 0.0, %v2379
        %2381 = vmatmul.f32.gmra.mxu0 %v1590
        %v2382 = vpop.f32.mrf.mxu0
        %v2383 = vadd.f32 0.0, %v2382
        %2384 = vmatmul.f32.gmra.mxu0 %v1593
        %v2385 = vpop.f32.mrf.mxu0
        %v2386 = vadd.f32 0.0, %v2385
        %2387 = vmatmul.f32.gmra.mxu0 %v1596
        %v2388 = vpop.f32.mrf.mxu0
        %v2389 = vadd.f32 0.0, %v2388
        %2390 = vmatmul.f32.gmra.mxu0 %v1599
        %v2391 = vpop.f32.mrf.mxu0
        %v2392 = vadd.f32 0.0, %v2391
        %2393 = vmatmul.f32.gmra.mxu0 %v1602
        %v2394 = vpop.f32.mrf.mxu0
        %v2395 = vadd.f32 0.0, %v2394
        %2396 = vmatmul.f32.gmra.mxu0 %v1605
        %v2397 = vpop.f32.mrf.mxu0
        %v2398 = vadd.f32 0.0, %v2397
        %2399 = vmatmul.f32.gmra.mxu0 %v1608
        %v2400 = vpop.f32.mrf.mxu0
        %v2401 = vadd.f32 0.0, %v2400
        %2402 = vmatmul.f32.gmra.mxu0 %v1611
        %v2403 = vpop.f32.mrf.mxu0
        %v2404 = vadd.f32 0.0, %v2403
        %2405 = vmatmul.f32.gmra.mxu0 %v1614
        %v2406 = vpop.f32.mrf.mxu0
        %v2407 = vadd.f32 0.0, %v2406
        %2408 = vmatmul.f32.gmra.mxu0 %v1617
        %v2409 = vpop.f32.mrf.mxu0
        %v2410 = vadd.f32 0.0, %v2409
        %2411 = vdwg.mxu0
        %v2412 = vmul.f32 %v2365, %v1554
        %v2413 = vmul.f32 %v2368, %v1555
        %v2414 = vmul.f32 %v2371, %v1556
        %v2415 = vmul.f32 %v2374, %v1557
        %v2416 = vmul.f32 %v2377, %v1558
        %v2417 = vmul.f32 %v2380, %v1559
        %v2418 = vmul.f32 %v2383, %v1560
        %v2419 = vmul.f32 %v2386, %v1561
        %v2420 = vmul.f32 %v2389, %v1562
        %v2421 = vmul.f32 %v2392, %v1563
        %v2422 = vmul.f32 %v2395, %v1564
        %v2423 = vmul.f32 %v2398, %v1565
        %v2424 = vmul.f32 %v2401, %v1566
        %v2425 = vmul.f32 %v2404, %v1567
        %v2426 = vmul.f32 %v2407, %v1568
        %v2427 = vmul.f32 %v2410, %v1569
        %2428 = vmatpush.msra.mxu0 %v2427
        %2429 = vmatpush.msra.mxu0 %v2426
        %2430 = vmatpush.msra.mxu0 %v2425
        %2431 = vmatpush.msra.mxu0 %v2424
        %2432 = vmatpush.msra.mxu0 %v2423
        %2433 = vmatpush.msra.mxu0 %v2422
        %2434 = vmatpush.msra.mxu0 %v2421
        %2435 = vmatpush.msra.mxu0 %v2420
        %2436 = vmatpush.msra.mxu0 %v2419
        %2437 = vmatpush.msra.mxu0 %v2418
        %2438 = vmatpush.msra.mxu0 %v2417
        %2439 = vmatpush.msra.mxu0 %v2416
        %2440 = vmatpush.msra.mxu0 %v2415
        %2441 = vmatpush.msra.mxu0 %v2414
        %2442 = vmatpush.msra.mxu0 %v2413
        %2443 = vmatpush.msra.mxu0 %v2412
        %2444 = vmatmul.f32.gmra.mxu0 %v1536
        %v2445 = vpop.f32.mrf.mxu0
        %v2446 = vadd.f32 0.0, %v2445
        %2447 = vmatmul.f32.gmra.mxu0 %v1537
        %v2448 = vpop.f32.mrf.mxu0
        %v2449 = vadd.f32 0.0, %v2448
        %2450 = vdwg.mxu0
        %v2451 = vadd.f32 %v321, %v1718
        %v2452 = vadd.f32 %v322, %v1721
        %v2453 = vadd.f32 %v323, %v1822
        %v2454 = vadd.f32 %v324, %v1825
        %v2455 = vadd.f32 %v325, %v1926
        %v2456 = vadd.f32 %v326, %v1929
        %v2457 = vadd.f32 %v327, %v2030
        %v2458 = vadd.f32 %v328, %v2033
        %v2459 = vadd.f32 %v329, %v2134
        %v2460 = vadd.f32 %v330, %v2137
        %v2461 = vadd.f32 %v331, %v2238
        %v2462 = vadd.f32 %v332, %v2241
        %v2463 = vadd.f32 %v333, %v2342
        %v2464 = vadd.f32 %v334, %v2345
        %v2465 = vadd.f32 %v335, %v2446
        %v2466 = vadd.f32 %v336, %v2449
        %2467 = vst.msk [vmem:[%s319] sm:$0xff] %vm349, %v2451
        %2468 = vst.msk [vmem:[%s319 + $0x8] sm:$0xff] %vm349, %v2452
        %2469 = vst.msk [vmem:[%s319 + $0x10] sm:$0xff] %vm349, %v2453
        %2470 = vst.msk [vmem:[%s319 + $0x18] sm:$0xff] %vm349, %v2454
        %2471 = vst.msk [vmem:[%s319 + $0x20] sm:$0xff] %vm349, %v2455
        %2472 = vst.msk [vmem:[%s319 + $0x28] sm:$0xff] %vm349, %v2456
        %2473 = vst.msk [vmem:[%s319 + $0x30] sm:$0xff] %vm349, %v2457
        %2474 = vst.msk [vmem:[%s319 + $0x38] sm:$0xff] %vm349, %v2458
        %2475 = vst.msk [vmem:[%s319 + $0x40] sm:$0xff] %vm349, %v2459
        %2476 = vst.msk [vmem:[%s319 + $0x48] sm:$0xff] %vm349, %v2460
        %2477 = vst.msk [vmem:[%s319 + $0x50] sm:$0xff] %vm349, %v2461
        %2478 = vst.msk [vmem:[%s319 + $0x58] sm:$0xff] %vm349, %v2462
        %2479 = vst.msk [vmem:[%s319 + $0x60] sm:$0xff] %vm349, %v2463
        %2480 = vst.msk [vmem:[%s319 + $0x68] sm:$0xff] %vm349, %v2464
        %2481 = vst.msk [vmem:[%s319 + $0x70] sm:$0xff] %vm349, %v2465
        %2482 = vst.msk [vmem:[%s319 + $0x78] sm:$0xff] %vm349, %v2466
        %s2483 = smul.u32 16, %s19
        %p2484 = scmp.lt.s32.totalorder %s2483, 31
        %s2485 = scalar_select %p2484, %s2483, 31
        %s2486 = smul.addr %s2485, 8
        %s2487 = scalar_lea.vmem %s7, %s2486
        // Predicated region
        $region53: #{tpu_custom_call.1} parent=47 // pred_check
          %p2488 = pneg %p194
        $region54: #{tpu_custom_call.1} parent=47 // pred_check_branch
          %2490 = sbr.rel (%p2488) target = $region56
        $region55: #{tpu_custom_call.1} parent=47 // pred_region
          %s2491 = smul.u32 16, %s19
        $region56: #{tpu_custom_call.1} parent=47 // pred_fallthru
          _
      $region48: #{tpu_custom_call.1} parent=5 // pred_fallthru
        _
      %p2492 = scmp.le.s32.totalorder 2, %s14
      // Predicated region
      $region57: #{tpu_custom_call.1} parent=5 // pred_check
        %p2493 = pneg %p2492
      $region58: #{tpu_custom_call.1} parent=5 // pred_check_branch
        %2495 = sbr.rel (%p2493) target = $region60
      $region59: #{tpu_custom_call.1} parent=5 // pred_region
        %s2496 = ssub.s32 %s14, 2
        // Predicated region
        $region61: #{tpu_custom_call.1} parent=59 // pred_check
          %p2497 = pneg %p200
        $region62: #{tpu_custom_call.1} parent=59 // pred_check_branch
          %2499 = sbr.rel (%p2497) target = $region64
        $region63: #{tpu_custom_call.1} parent=59 // pred_region
          %s2500 = smul.u32 16, %s20
          %p2501 = scmp.lt.s32.totalorder %s2500, 31
          %s2502 = scalar_select %p2501, %s2500, 31
          %s2503 = smul.addr %s2502, 8
          %s2504 = scalar_lea.vmem %s7, %s2503
        $region64: #{tpu_custom_call.1} parent=59 // pred_fallthru
          _
      $region60: #{tpu_custom_call.1} parent=5 // pred_fallthru
        _
    $region6: #{tpu_custom_call.1} parent=1 // loop_footer
      %s18 = sadd.s32 1, %s14
    $region7: #{tpu_custom_call.1} parent=1 // loop_footer_branch
      %13 = sbr.rel target = $region3
    $region8: #{tpu_custom_call.1} parent=1 // loop_exit
      _
    %2505 = vsyncpa [#allocation3], 1
    %s2506 = scalar_lea.sflag [#allocation3], 1
    %2507 = vsyncpa %s2506, 1

</llo_original>
